<compile_context>
chip_gen: v7x
topology: tpu7x:2x2x1
jax: 0.10.0
libtpu: 0.0.40
codegen_flags: <defaults>
</compile_context>

<pallas_src>
import functools

import jax
import jax.numpy as jnp
from jax.experimental import pallas as pl
from jax.experimental.pallas import tpu as pltpu


def ir_model_kernel(idx_ref, qidx_ref, tgt_ref,
                    tab_ref, tabqT_ref, bq_ref, bp_ref, bqc_ref,
                    wh_ref, bh_ref, wl_ref, bl_ref,
                    logp_ref, nll_ref,
                    *, R, P, V, pad_index):
    """One batch element per grid step; bf16 MXU inputs, f32 accumulation."""
    N = idx_ref.shape[1]                 # Q + R*P combined tokens
    Q = qidx_ref.shape[2]
    twoV, D = tab_ref.shape
    R_PAD = logp_ref.shape[2]
    NEG = jnp.float32(-1e30)

    idx_col = idx_ref[0]                 # (N, 1) int32; p tokens pre-offset by +V
    q_idx_row = qidx_ref[0]              # (1, Q) int32
    tgt_row = tgt_ref[0]                 # (1, R_PAD) f32 one-hot (zeros in pad lanes)

    # token validity: pad -> index `pad_index` for q rows, `pad_index + V` for p rows
    tok_valid = jnp.logical_and(idx_col != pad_index, idx_col != pad_index + V)
    tok_maskf = tok_valid.astype(jnp.float32)                 # (N, 1)
    q_mask_row = q_idx_row != pad_index                       # (1, Q)

    # ---- fused embedding + token encoders: one block-diagonal one-hot matmul ----
    class_ids = jax.lax.broadcasted_iota(jnp.int32, (N, twoV), 1)
    onehot = (idx_col == class_ids).astype(jnp.bfloat16)      # (N, 2V)
    enc = jnp.dot(onehot, tab_ref[...],
                  preferred_element_type=jnp.float32)         # (N, D) f32
    q_enc = jnp.tanh(enc[:Q, :] + bq_ref[...]) * tok_maskf[:Q, :]    # (Q, D)
    p_enc = jnp.tanh(enc[Q:, :] + bp_ref[...]) * tok_maskf[Q:, :]    # (R*P, D)

    # ---- question encoding directly in (D, Q) layout: no in-kernel transpose ----
    vclass_ids = jax.lax.broadcasted_iota(jnp.int32, (V, Q), 0)
    onehot_qT = (vclass_ids == q_idx_row).astype(jnp.bfloat16)       # (V, Q)
    q_encT = jnp.tanh(jnp.dot(tabqT_ref[...], onehot_qT,
                              preferred_element_type=jnp.float32) + bqc_ref[...])
    q_encT = q_encT * q_mask_row.astype(jnp.float32)                 # (D, Q)

    # ---- attention: paragraph tokens attend over question tokens ----
    scores = jnp.dot(p_enc.astype(jnp.bfloat16), q_encT.astype(jnp.bfloat16),
                     preferred_element_type=jnp.float32)             # (R*P, Q)
    scores = jnp.where(q_mask_row, scores, NEG)
    smax = jnp.max(scores, axis=-1, keepdims=True)
    pexp = jnp.exp(scores - smax)                                    # denom >= 1 always
    att = pexp * pl.reciprocal(jnp.sum(pexp, axis=-1, keepdims=True), approx=True)
    x4 = jnp.dot(att.astype(jnp.bfloat16), q_enc.astype(jnp.bfloat16),
                 preferred_element_type=jnp.float32)                 # (R*P, D)

    # mask pad paragraph positions so they cannot win the max over P
    x4 = jnp.where(tok_valid[Q:, :], x4, NEG)
    x = jnp.max(x4.reshape(R, P, D), axis=1)                         # (R, D)

    # ---- hidden Linear + ReLU, final Linear(H -> 1) ----
    h = jnp.maximum(jnp.dot(x.astype(jnp.bfloat16), wh_ref[...],
                            preferred_element_type=jnp.float32) + bh_ref[...], 0.0)
    logits_col = jnp.dot(h.astype(jnp.bfloat16), wl_ref[...],
                         preferred_element_type=jnp.float32) + bl_ref[...]   # (R, 1)

    # place logits on lanes, padded to R_PAD (lane-dense, unmasked store)
    row_ids = jax.lax.broadcasted_iota(jnp.int32, (R, R_PAD), 0)
    col_ids = jax.lax.broadcasted_iota(jnp.int32, (R, R_PAD), 1)
    sel = (row_ids == col_ids).astype(jnp.float32)                   # (R, R_PAD)
    logits_row = jnp.sum(logits_col * sel, axis=0, keepdims=True)    # (1, R_PAD)
    lane_ids = jax.lax.broadcasted_iota(jnp.int32, (1, R_PAD), 1)
    logits_row = jnp.where(lane_ids < R, logits_row, NEG)

    # log_softmax over the (padded) ratio axis + NLL(reduction='none')
    m = jnp.max(logits_row, axis=-1, keepdims=True)
    z = logits_row - m
    lse = jnp.log(jnp.sum(jnp.exp(z), axis=-1, keepdims=True))
    logp = z - lse                                                   # (1, R_PAD)
    logp_ref[0] = logp
    nll_ref[0] = -jnp.sum(logp * tgt_row, axis=-1, keepdims=True)    # (1, 1)


def ir_model_forward(q_idx, p_idx, target, params, pad_index=0):
    """Index/table prep (cheap XLA) + one fused Pallas call, grid over batch."""
    emb = params['embedding']                                 # (V, E)
    V, _ = emb.shape
    wq, bq = params['wq'], params['bq']                       # (E, D), (1, D)
    wp, bp = params['wp'], params['bp']
    wh, bh = params['wh'], params['bh']                       # (D, H), (1, H)
    wl, bl = params['wl'], params['bl']                       # (H, 1), (1, 1)
    D, H = wh.shape
    B, Q = q_idx.shape
    _, R, P = p_idx.shape
    N = Q + R * P
    R_PAD = 128 * ((R + 127) // 128)

    # Fold embedding-lookup ∘ Linear into per-vocab tables (same linear map);
    # stacking gives the block-diagonal table for the single in-kernel matmul.
    table_q = jnp.dot(emb, wq)                                # (V, D) f32
    table_p = jnp.dot(emb, wp)
    table_cat = jnp.concatenate([table_q, table_p], axis=0).astype(jnp.bfloat16)
    table_qT = table_q.T.astype(jnp.bfloat16)                 # (D, V)

    idx_all = jnp.concatenate(
        [q_idx.astype(jnp.int32),
         p_idx.reshape(B, R * P).astype(jnp.int32) + V], axis=1).reshape(B, N, 1)
    q_idx_in = q_idx.astype(jnp.int32).reshape(B, 1, Q)
    tgt_pad = jax.nn.one_hot(target, R_PAD, dtype=jnp.float32).reshape(B, 1, R_PAD)

    bq_col = bq.reshape(D, 1)
    wh_bf = wh.astype(jnp.bfloat16)
    wl_bf = wl.astype(jnp.bfloat16)

    kernel = functools.partial(ir_model_kernel, R=R, P=P, V=V, pad_index=pad_index)

    def batch_spec(shape):
        return pl.BlockSpec(shape, lambda b: (b, 0, 0))

    def const_spec(shape):
        return pl.BlockSpec(shape, lambda b: (0, 0))

    flops = 2 * B * (N * (2 * V) * D + D * V * Q + 2 * (R * P) * D * Q
                     + R * D * H + R * H)
    transcend = B * (N * D + D * Q + (R * P) * Q + R_PAD + 1)
    bytes_acc = (B * 4 * (N + Q + 2 * R_PAD + 1)
                 + 2 * (2 * V * D + D * V + D * H + H)
                 + 4 * (3 * D + H + 1))

    logp_pad, nll3 = pl.pallas_call(
        kernel,
        out_shape=(jax.ShapeDtypeStruct((B, 1, R_PAD), jnp.float32),
                   jax.ShapeDtypeStruct((B, 1, 1), jnp.float32)),
        grid=(B,),
        in_specs=[
            batch_spec((1, N, 1)),         # combined token indices (p offset by +V)
            batch_spec((1, 1, Q)),         # question indices, row layout
            batch_spec((1, 1, R_PAD)),     # one-hot target, lane-padded
            const_spec((2 * V, D)),        # block-diagonal embed+encoder table (bf16)
            const_spec((D, V)),            # transposed question table (bf16)
            const_spec((1, D)),            # bq
            const_spec((1, D)),            # bp
            const_spec((D, 1)),            # bq as column
            const_spec((D, H)),            # wh (bf16)
            const_spec((1, H)),            # bh
            const_spec((H, 1)),            # wl (bf16)
            const_spec((1, 1)),            # bl
        ],
        out_specs=(batch_spec((1, 1, R_PAD)), batch_spec((1, 1, 1))),
        compiler_params=pltpu.CompilerParams(
            dimension_semantics=("parallel",),
            vmem_limit_bytes=32 * 1024 * 1024),
        cost_estimate=pl.CostEstimate(flops=flops, transcendentals=transcend,
                                      bytes_accessed=bytes_acc),
    )(idx_all, q_idx_in, tgt_pad, table_cat, table_qT,
      bq, bp, bq_col, wh_bf, bh, wl_bf, bl)

    return {'log_probs': logp_pad.reshape(B, R_PAD)[:, :R],
            'nll': nll3.reshape(B)}


def init_params(key, vocab=50, embed_dim=16, enc_dim=32, hidden_dim=32):
    ks = jax.random.split(key, 6)

    def xavier_normal(k, shape, gain=1.0):
        fan_in, fan_out = shape
        std = gain * (2.0 / (fan_in + fan_out)) ** 0.5
        return std * jax.random.normal(k, shape, dtype=jnp.float32)

    relu_gain = 2.0 ** 0.5  # nn.init.calculate_gain('relu')
    embedding = 0.1 * jax.random.normal(ks[0], (vocab, embed_dim), dtype=jnp.float32)
    embedding = embedding.at[0].set(0.0)  # pad row

    return dict(
        embedding=embedding,
        wq=xavier_normal(ks[1], (embed_dim, enc_dim)),
        bq=jnp.zeros((1, enc_dim), jnp.float32),
        wp=xavier_normal(ks[2], (embed_dim, enc_dim)),
        bp=jnp.zeros((1, enc_dim), jnp.float32),
        wh=xavier_normal(ks[3], (enc_dim, hidden_dim), gain=relu_gain),
        bh=jnp.zeros((1, hidden_dim), jnp.float32),
        wl=xavier_normal(ks[4], (hidden_dim, 1)),
        bl=jnp.zeros((1, 1), jnp.float32),
    )


if __name__ == "__main__":
    key = jax.random.PRNGKey(0)
    k_param, k_q, k_p, k_t = jax.random.split(key, 4)

    B, R, Q, P = 2, 4, 8, 8           # batch, paragraphs/question, q_len, p_len
    V, E, D, H = 50, 16, 32, 32       # vocab, embed, encoder/attention out, hidden

    params = init_params(k_param, V, E, D, H)

    q_idx = jax.random.randint(k_q, (B, Q), 1, V)
    q_idx = q_idx.at[:, -2:].set(0)            # trailing pad tokens
    p_idx = jax.random.randint(k_p, (B, R, P), 1, V)
    p_idx = p_idx.at[:, :, -3:].set(0)         # trailing pad tokens
    target = jax.random.randint(k_t, (B,), 0, R)

    out = ir_model_forward(q_idx, p_idx, target, params)
    jax.block_until_ready(out)
    assert out['log_probs'].shape == (B, R) and out['nll'].shape == (B,)
    assert bool(jnp.all(jnp.isfinite(out['log_probs'])))
    assert bool(jnp.all(jnp.isfinite(out['nll'])))
    print("KERNEL_OK")
</pallas_src>

<mosaic_0001>
module attributes {stable_mosaic.version = 11 : i64} {
  func.func @ir_model_kernel(%arg0: i32, %arg1: memref<1x40x1xi32, #tpu.memory_space<vmem>>, %arg2: memref<1x1x8xi32, #tpu.memory_space<vmem>>, %arg3: memref<1x1x128xf32, #tpu.memory_space<vmem>>, %arg4: memref<100x32xbf16, #tpu.memory_space<vmem>>, %arg5: memref<32x50xbf16, #tpu.memory_space<vmem>>, %arg6: memref<1x32xf32, #tpu.memory_space<vmem>>, %arg7: memref<1x32xf32, #tpu.memory_space<vmem>>, %arg8: memref<32x1xf32, #tpu.memory_space<vmem>>, %arg9: memref<32x32xbf16, #tpu.memory_space<vmem>>, %arg10: memref<1x32xf32, #tpu.memory_space<vmem>>, %arg11: memref<32x1xbf16, #tpu.memory_space<vmem>>, %arg12: memref<1x1xf32, #tpu.memory_space<vmem>>, %arg13: memref<1x1x128xf32, #tpu.memory_space<vmem>>, %arg14: memref<1x1x1xf32, #tpu.memory_space<vmem>>) attributes {dimension_semantics = [#tpu.dimension_semantics<parallel>], iteration_bounds = array<i64: 2>, scalar_prefetch = 0 : i64, scratch_operands = 0 : i64, tpu.core_type = #tpu.core_type<tc>, window_params = [{transform_indices = @transform_0, window_bounds = array<i64: 1, 40, 1>}, {transform_indices = @transform_1, window_bounds = array<i64: 1, 1, 8>}, {transform_indices = @transform_2, window_bounds = array<i64: 1, 1, 128>}, {pipeline_mode = #tpu.pipeline_mode<synchronous>, transform_indices = @transform_3, window_bounds = array<i64: 100, 32>}, {pipeline_mode = #tpu.pipeline_mode<synchronous>, transform_indices = @transform_4, window_bounds = array<i64: 32, 50>}, {pipeline_mode = #tpu.pipeline_mode<synchronous>, transform_indices = @transform_5, window_bounds = array<i64: 1, 32>}, {pipeline_mode = #tpu.pipeline_mode<synchronous>, transform_indices = @transform_6, window_bounds = array<i64: 1, 32>}, {pipeline_mode = #tpu.pipeline_mode<synchronous>, transform_indices = @transform_7, window_bounds = array<i64: 32, 1>}, {pipeline_mode = #tpu.pipeline_mode<synchronous>, transform_indices = @transform_8, window_bounds = array<i64: 32, 32>}, {pipeline_mode = #tpu.pipeline_mode<synchronous>, transform_indices = @transform_9, window_bounds = array<i64: 1, 32>}, {pipeline_mode = #tpu.pipeline_mode<synchronous>, transform_indices = @transform_10, window_bounds = array<i64: 32, 1>}, {pipeline_mode = #tpu.pipeline_mode<synchronous>, transform_indices = @transform_11, window_bounds = array<i64: 1, 1>}, {transform_indices = @transform_12, window_bounds = array<i64: 1, 1, 128>}, {transform_indices = @transform_13, window_bounds = array<i64: 1, 1, 1>}]} {
    %c0 = arith.constant 0 : index
    %c0_0 = arith.constant 0 : index
    %c0_1 = arith.constant 0 : index
    %0 = vector.load %arg1[%c0, %c0_0, %c0_1] : memref<1x40x1xi32, #tpu.memory_space<vmem>>, vector<1x40x1xi32>
    %1 = vector.shape_cast %0 : vector<1x40x1xi32> to vector<40x1xi32>
    %c0_2 = arith.constant 0 : index
    %c0_3 = arith.constant 0 : index
    %c0_4 = arith.constant 0 : index
    %2 = vector.load %arg2[%c0_2, %c0_3, %c0_4] : memref<1x1x8xi32, #tpu.memory_space<vmem>>, vector<1x1x8xi32>
    %3 = vector.shape_cast %2 : vector<1x1x8xi32> to vector<1x8xi32>
    %c0_5 = arith.constant 0 : index
    %c0_6 = arith.constant 0 : index
    %c0_7 = arith.constant 0 : index
    %4 = vector.load %arg3[%c0_5, %c0_6, %c0_7] : memref<1x1x128xf32, #tpu.memory_space<vmem>>, vector<1x1x128xf32>
    %5 = vector.shape_cast %4 : vector<1x1x128xf32> to vector<1x128xf32>
    %c0_i32 = arith.constant 0 : i32
    %6 = vector.broadcast %c0_i32 : i32 to vector<40x1xi32>
    %7 = arith.cmpi ne, %1, %6 : vector<40x1xi32>
    %c50_i32 = arith.constant 50 : i32
    %8 = vector.broadcast %c50_i32 : i32 to vector<40x1xi32>
    %9 = arith.cmpi ne, %1, %8 : vector<40x1xi32>
    %10 = arith.andi %7, %9 : vector<40x1xi1>
    %11 = arith.extui %10 : vector<40x1xi1> to vector<40x1xi32>
    %12 = arith.sitofp %11 : vector<40x1xi32> to vector<40x1xf32>
    %c0_i32_8 = arith.constant 0 : i32
    %13 = vector.broadcast %c0_i32_8 : i32 to vector<1x8xi32>
    %14 = arith.cmpi ne, %3, %13 : vector<1x8xi32>
    %15 = tpu.iota {dimensions = array<i32: 1>} : vector<40x100xi32>
    %16 = vector.broadcast %1 : vector<40x1xi32> to vector<40x100xi32>
    %17 = arith.cmpi eq, %16, %15 : vector<40x100xi32>
    %18 = arith.extui %17 : vector<40x100xi1> to vector<40x100xi32>
    %19 = arith.sitofp %18 : vector<40x100xi32> to vector<40x100xf32>
    %20 = arith.truncf %19 : vector<40x100xf32> to vector<40x100xbf16>
    %c0_9 = arith.constant 0 : index
    %c0_10 = arith.constant 0 : index
    %21 = vector.load %arg4[%c0_9, %c0_10] : memref<100x32xbf16, #tpu.memory_space<vmem>>, vector<100x32xbf16>
    %cst = arith.constant dense<0.000000e+00> : vector<40x32xf32>
    %22 = tpu.matmul %20, %21, %cst {dimension_numbers = #tpu.dot_dimension_numbers<[1], [0], [0], [1], [0, 0, 1, 1], [], []>} : vector<40x100xbf16>, vector<100x32xbf16>, vector<40x32xf32> -> vector<40x32xf32>
    %23 = vector.extract_strided_slice %22 {offsets = [0, 0], sizes = [8, 32], strides = [1, 1]} : vector<40x32xf32> to vector<8x32xf32>
    %c0_11 = arith.constant 0 : index
    %c0_12 = arith.constant 0 : index
    %24 = vector.load %arg6[%c0_11, %c0_12] : memref<1x32xf32, #tpu.memory_space<vmem>>, vector<1x32xf32>
    %25 = vector.broadcast %24 : vector<1x32xf32> to vector<8x32xf32>
    %26 = arith.addf %23, %25 : vector<8x32xf32>
    %27 = math.tanh %26 : vector<8x32xf32>
    %28 = vector.extract_strided_slice %12 {offsets = [0, 0], sizes = [8, 1], strides = [1, 1]} : vector<40x1xf32> to vector<8x1xf32>
    %29 = vector.broadcast %28 : vector<8x1xf32> to vector<8x32xf32>
    %30 = arith.mulf %27, %29 : vector<8x32xf32>
    %31 = vector.extract_strided_slice %22 {offsets = [8, 0], sizes = [32, 32], strides = [1, 1]} : vector<40x32xf32> to vector<32x32xf32>
    %c0_13 = arith.constant 0 : index
    %c0_14 = arith.constant 0 : index
    %32 = vector.load %arg7[%c0_13, %c0_14] : memref<1x32xf32, #tpu.memory_space<vmem>>, vector<1x32xf32>
    %33 = vector.broadcast %32 : vector<1x32xf32> to vector<32x32xf32>
    %34 = arith.addf %31, %33 : vector<32x32xf32>
    %35 = math.tanh %34 : vector<32x32xf32>
    %36 = vector.extract_strided_slice %12 {offsets = [8, 0], sizes = [32, 1], strides = [1, 1]} : vector<40x1xf32> to vector<32x1xf32>
    %37 = vector.broadcast %36 : vector<32x1xf32> to vector<32x32xf32>
    %38 = arith.mulf %35, %37 : vector<32x32xf32>
    %39 = tpu.iota {dimensions = array<i32: 0>} : vector<50x8xi32>
    %40 = vector.broadcast %3 : vector<1x8xi32> to vector<50x8xi32>
    %41 = arith.cmpi eq, %39, %40 : vector<50x8xi32>
    %42 = arith.extui %41 : vector<50x8xi1> to vector<50x8xi32>
    %43 = arith.sitofp %42 : vector<50x8xi32> to vector<50x8xf32>
    %44 = arith.truncf %43 : vector<50x8xf32> to vector<50x8xbf16>
    %c0_15 = arith.constant 0 : index
    %c0_16 = arith.constant 0 : index
    %45 = vector.load %arg5[%c0_15, %c0_16] : memref<32x50xbf16, #tpu.memory_space<vmem>>, vector<32x50xbf16>
    %cst_17 = arith.constant dense<0.000000e+00> : vector<32x8xf32>
    %46 = tpu.matmul %45, %44, %cst_17 {dimension_numbers = #tpu.dot_dimension_numbers<[1], [0], [0], [1], [0, 0, 1, 1], [], []>} : vector<32x50xbf16>, vector<50x8xbf16>, vector<32x8xf32> -> vector<32x8xf32>
    %c0_18 = arith.constant 0 : index
    %c0_19 = arith.constant 0 : index
    %47 = vector.load %arg8[%c0_18, %c0_19] : memref<32x1xf32, #tpu.memory_space<vmem>>, vector<32x1xf32>
    %48 = vector.broadcast %47 : vector<32x1xf32> to vector<32x8xf32>
    %49 = arith.addf %46, %48 : vector<32x8xf32>
    %50 = math.tanh %49 : vector<32x8xf32>
    %51 = arith.extui %14 : vector<1x8xi1> to vector<1x8xi32>
    %52 = arith.sitofp %51 : vector<1x8xi32> to vector<1x8xf32>
    %53 = vector.broadcast %52 : vector<1x8xf32> to vector<32x8xf32>
    %54 = arith.mulf %50, %53 : vector<32x8xf32>
    %55 = arith.truncf %38 : vector<32x32xf32> to vector<32x32xbf16>
    %56 = arith.truncf %54 : vector<32x8xf32> to vector<32x8xbf16>
    %cst_20 = arith.constant dense<0.000000e+00> : vector<32x8xf32>
    %57 = tpu.matmul %55, %56, %cst_20 {dimension_numbers = #tpu.dot_dimension_numbers<[1], [0], [0], [1], [0, 0, 1, 1], [], []>} : vector<32x32xbf16>, vector<32x8xbf16>, vector<32x8xf32> -> vector<32x8xf32>
    %cst_21 = arith.constant -1.000000e+30 : f32
    %58 = vector.shape_cast %14 : vector<1x8xi1> to vector<1x8xi1>
    %59 = vector.broadcast %58 : vector<1x8xi1> to vector<32x8xi1>
    %60 = vector.broadcast %cst_21 : f32 to vector<32x8xf32>
    %61 = arith.select %59, %57, %60 : vector<32x8xi1>, vector<32x8xf32>
    %cst_22 = arith.constant dense<0xFF800000> : vector<32xf32>
    %62 = vector.multi_reduction <maximumf>, %61, %cst_22 [1] : vector<32x8xf32> to vector<32xf32>
    %63 = vector.shape_cast %62 : vector<32xf32> to vector<32x1xf32>
    %64 = vector.broadcast %63 : vector<32x1xf32> to vector<32x8xf32>
    %65 = arith.subf %61, %64 : vector<32x8xf32>
    %66 = math.exp %65 : vector<32x8xf32>
    %cst_23 = arith.constant dense<0.000000e+00> : vector<32xf32>
    %67 = vector.multi_reduction <add>, %66, %cst_23 [1] : vector<32x8xf32> to vector<32xf32>
    %68 = vector.shape_cast %67 : vector<32xf32> to vector<32x1xf32>
    %69 = tpu.reciprocal %68 {approx = true} : vector<32x1xf32> -> vector<32x1xf32>
    %70 = vector.broadcast %69 : vector<32x1xf32> to vector<32x8xf32>
    %71 = arith.mulf %66, %70 : vector<32x8xf32>
    %72 = arith.truncf %71 : vector<32x8xf32> to vector<32x8xbf16>
    %73 = arith.truncf %30 : vector<8x32xf32> to vector<8x32xbf16>
    %cst_24 = arith.constant dense<0.000000e+00> : vector<32x32xf32>
    %74 = tpu.matmul %72, %73, %cst_24 {dimension_numbers = #tpu.dot_dimension_numbers<[1], [0], [0], [1], [0, 0, 1, 1], [], []>} : vector<32x8xbf16>, vector<8x32xbf16>, vector<32x32xf32> -> vector<32x32xf32>
    %75 = vector.extract_strided_slice %10 {offsets = [8, 0], sizes = [32, 1], strides = [1, 1]} : vector<40x1xi1> to vector<32x1xi1>
    %cst_25 = arith.constant -1.000000e+30 : f32
    %76 = vector.shape_cast %75 : vector<32x1xi1> to vector<32x1xi1>
    %77 = vector.broadcast %76 : vector<32x1xi1> to vector<32x32xi1>
    %78 = vector.broadcast %cst_25 : f32 to vector<32x32xf32>
    %79 = arith.select %77, %74, %78 : vector<32x32xi1>, vector<32x32xf32>
    %80 = vector.shape_cast %79 : vector<32x32xf32> to vector<4x8x32xf32>
    %cst_26 = arith.constant dense<0xFF800000> : vector<4x32xf32>
    %81 = vector.multi_reduction <maximumf>, %80, %cst_26 [1] : vector<4x8x32xf32> to vector<4x32xf32>
    %82 = arith.truncf %81 : vector<4x32xf32> to vector<4x32xbf16>
    %c0_27 = arith.constant 0 : index
    %c0_28 = arith.constant 0 : index
    %83 = vector.load %arg9[%c0_27, %c0_28] : memref<32x32xbf16, #tpu.memory_space<vmem>>, vector<32x32xbf16>
    %cst_29 = arith.constant dense<0.000000e+00> : vector<4x32xf32>
    %84 = tpu.matmul %82, %83, %cst_29 {dimension_numbers = #tpu.dot_dimension_numbers<[1], [0], [0], [1], [0, 0, 1, 1], [], []>} : vector<4x32xbf16>, vector<32x32xbf16>, vector<4x32xf32> -> vector<4x32xf32>
    %c0_30 = arith.constant 0 : index
    %c0_31 = arith.constant 0 : index
    %85 = vector.load %arg10[%c0_30, %c0_31] : memref<1x32xf32, #tpu.memory_space<vmem>>, vector<1x32xf32>
    %86 = vector.broadcast %85 : vector<1x32xf32> to vector<4x32xf32>
    %87 = arith.addf %84, %86 : vector<4x32xf32>
    %cst_32 = arith.constant 0.000000e+00 : f32
    %88 = vector.broadcast %cst_32 : f32 to vector<4x32xf32>
    %89 = arith.maximumf %87, %88 : vector<4x32xf32>
    %90 = arith.truncf %89 : vector<4x32xf32> to vector<4x32xbf16>
    %c0_33 = arith.constant 0 : index
    %c0_34 = arith.constant 0 : index
    %91 = vector.load %arg11[%c0_33, %c0_34] : memref<32x1xbf16, #tpu.memory_space<vmem>>, vector<32x1xbf16>
    %cst_35 = arith.constant dense<0.000000e+00> : vector<4x1xf32>
    %92 = tpu.matmul %90, %91, %cst_35 {dimension_numbers = #tpu.dot_dimension_numbers<[1], [0], [0], [1], [0, 0, 1, 1], [], []>} : vector<4x32xbf16>, vector<32x1xbf16>, vector<4x1xf32> -> vector<4x1xf32>
    %c0_36 = arith.constant 0 : index
    %c0_37 = arith.constant 0 : index
    %93 = vector.load %arg12[%c0_36, %c0_37] : memref<1x1xf32, #tpu.memory_space<vmem>>, vector<1x1xf32>
    %94 = vector.broadcast %93 : vector<1x1xf32> to vector<4x1xf32>
    %95 = arith.addf %92, %94 : vector<4x1xf32>
    %96 = tpu.iota {dimensions = array<i32: 0>} : vector<4x128xi32>
    %97 = tpu.iota {dimensions = array<i32: 1>} : vector<4x128xi32>
    %98 = arith.cmpi eq, %96, %97 : vector<4x128xi32>
    %99 = arith.extui %98 : vector<4x128xi1> to vector<4x128xi32>
    %100 = arith.sitofp %99 : vector<4x128xi32> to vector<4x128xf32>
    %101 = vector.broadcast %95 : vector<4x1xf32> to vector<4x128xf32>
    %102 = arith.mulf %101, %100 : vector<4x128xf32>
    %cst_38 = arith.constant dense<0.000000e+00> : vector<128xf32>
    %103 = vector.multi_reduction <add>, %102, %cst_38 [0] : vector<4x128xf32> to vector<128xf32>
    %104 = vector.shape_cast %103 : vector<128xf32> to vector<1x128xf32>
    %105 = tpu.iota {dimensions = array<i32: 1>} : vector<1x128xi32>
    %c4_i32 = arith.constant 4 : i32
    %106 = vector.broadcast %c4_i32 : i32 to vector<1x128xi32>
    %107 = arith.cmpi slt, %105, %106 : vector<1x128xi32>
    %cst_39 = arith.constant -1.000000e+30 : f32
    %108 = vector.broadcast %cst_39 : f32 to vector<1x128xf32>
    %109 = arith.select %107, %104, %108 : vector<1x128xi1>, vector<1x128xf32>
    %cst_40 = arith.constant dense<0xFF800000> : vector<1xf32>
    %110 = vector.multi_reduction <maximumf>, %109, %cst_40 [1] : vector<1x128xf32> to vector<1xf32>
    %111 = vector.shape_cast %110 : vector<1xf32> to vector<1x1xf32>
    %112 = vector.broadcast %111 : vector<1x1xf32> to vector<1x128xf32>
    %113 = arith.subf %109, %112 : vector<1x128xf32>
    %114 = math.exp %113 : vector<1x128xf32>
    %cst_41 = arith.constant dense<0.000000e+00> : vector<1xf32>
    %115 = vector.multi_reduction <add>, %114, %cst_41 [1] : vector<1x128xf32> to vector<1xf32>
    %116 = vector.shape_cast %115 : vector<1xf32> to vector<1x1xf32>
    %117 = math.log %116 : vector<1x1xf32>
    %118 = vector.broadcast %117 : vector<1x1xf32> to vector<1x128xf32>
    %119 = arith.subf %113, %118 : vector<1x128xf32>
    %c0_42 = arith.constant 0 : index
    %c0_43 = arith.constant 0 : index
    %c0_44 = arith.constant 0 : index
    %120 = vector.load %arg13[%c0_42, %c0_43, %c0_44] : memref<1x1x128xf32, #tpu.memory_space<vmem>>, vector<1x1x128xf32>
    %121 = vector.shape_cast %120 : vector<1x1x128xf32> to vector<1x128xf32>
    %122 = vector.shape_cast %119 : vector<1x128xf32> to vector<1x1x128xf32>
    tpu.vector_store %arg13[%c0_42, %c0_43, %c0_44], %122 {strides = array<i32>} : memref<1x1x128xf32, #tpu.memory_space<vmem>>, vector<1x1x128xf32>,
    %123 = arith.mulf %119, %5 : vector<1x128xf32>
    %cst_45 = arith.constant dense<0.000000e+00> : vector<1xf32>
    %124 = vector.multi_reduction <add>, %123, %cst_45 [1] : vector<1x128xf32> to vector<1xf32>
    %125 = vector.shape_cast %124 : vector<1xf32> to vector<1x1xf32>
    %cst_46 = arith.constant 0.000000e+00 : f32
    %126 = vector.broadcast %cst_46 : f32 to vector<1x1xf32>
    %127 = arith.subf %126, %125 : vector<1x1xf32>
    %c0_47 = arith.constant 0 : index
    %c0_48 = arith.constant 0 : index
    %c0_49 = arith.constant 0 : index
    %128 = vector.load %arg14[%c0_47, %c0_48, %c0_49] : memref<1x1x1xf32, #tpu.memory_space<vmem>>, vector<1x1x1xf32>
    %129 = vector.shape_cast %128 : vector<1x1x1xf32> to vector<1x1xf32>
    %130 = vector.shape_cast %127 : vector<1x1xf32> to vector<1x1x1xf32>
    tpu.vector_store %arg14[%c0_47, %c0_48, %c0_49], %130 {strides = array<i32>} : memref<1x1x1xf32, #tpu.memory_space<vmem>>, vector<1x1x1xf32>,
    return
  }
  func.func @transform_0(%arg0: i32) -> (i32, i32, i32) {
    %c0_i32 = arith.constant 0 : i32
    %c0_i32_0 = arith.constant 0 : i32
    %c0_i32_1 = arith.constant 0 : i32
    return %arg0, %c0_i32, %c0_i32_0 : i32, i32, i32
  }
  func.func @transform_1(%arg0: i32) -> (i32, i32, i32) {
    %c0_i32 = arith.constant 0 : i32
    %c0_i32_0 = arith.constant 0 : i32
    %c0_i32_1 = arith.constant 0 : i32
    return %arg0, %c0_i32, %c0_i32_0 : i32, i32, i32
  }
  func.func @transform_2(%arg0: i32) -> (i32, i32, i32) {
    %c0_i32 = arith.constant 0 : i32
    %c0_i32_0 = arith.constant 0 : i32
    %c0_i32_1 = arith.constant 0 : i32
    return %arg0, %c0_i32, %c0_i32_0 : i32, i32, i32
  }
  func.func @transform_3(%arg0: i32) -> (i32, i32) {
    %c0_i32 = arith.constant 0 : i32
    %c0_i32_0 = arith.constant 0 : i32
    %c0_i32_1 = arith.constant 0 : i32
    return %c0_i32, %c0_i32_0 : i32, i32
  }
  func.func @transform_4(%arg0: i32) -> (i32, i32) {
    %c0_i32 = arith.constant 0 : i32
    %c0_i32_0 = arith.constant 0 : i32
    %c0_i32_1 = arith.constant 0 : i32
    return %c0_i32, %c0_i32_0 : i32, i32
  }
  func.func @transform_5(%arg0: i32) -> (i32, i32) {
    %c0_i32 = arith.constant 0 : i32
    %c0_i32_0 = arith.constant 0 : i32
    %c0_i32_1 = arith.constant 0 : i32
    return %c0_i32, %c0_i32_0 : i32, i32
  }
  func.func @transform_6(%arg0: i32) -> (i32, i32) {
    %c0_i32 = arith.constant 0 : i32
    %c0_i32_0 = arith.constant 0 : i32
    %c0_i32_1 = arith.constant 0 : i32
    return %c0_i32, %c0_i32_0 : i32, i32
  }
  func.func @transform_7(%arg0: i32) -> (i32, i32) {
    %c0_i32 = arith.constant 0 : i32
    %c0_i32_0 = arith.constant 0 : i32
    %c0_i32_1 = arith.constant 0 : i32
    return %c0_i32, %c0_i32_0 : i32, i32
  }
  func.func @transform_8(%arg0: i32) -> (i32, i32) {
    %c0_i32 = arith.constant 0 : i32
    %c0_i32_0 = arith.constant 0 : i32
    %c0_i32_1 = arith.constant 0 : i32
    return %c0_i32, %c0_i32_0 : i32, i32
  }
  func.func @transform_9(%arg0: i32) -> (i32, i32) {
    %c0_i32 = arith.constant 0 : i32
    %c0_i32_0 = arith.constant 0 : i32
    %c0_i32_1 = arith.constant 0 : i32
    return %c0_i32, %c0_i32_0 : i32, i32
  }
  func.func @transform_10(%arg0: i32) -> (i32, i32) {
    %c0_i32 = arith.constant 0 : i32
    %c0_i32_0 = arith.constant 0 : i32
    %c0_i32_1 = arith.constant 0 : i32
    return %c0_i32, %c0_i32_0 : i32, i32
  }
  func.func @transform_11(%arg0: i32) -> (i32, i32) {
    %c0_i32 = arith.constant 0 : i32
    %c0_i32_0 = arith.constant 0 : i32
    %c0_i32_1 = arith.constant 0 : i32
    return %c0_i32, %c0_i32_0 : i32, i32
  }
  func.func @transform_12(%arg0: i32) -> (i32, i32, i32) {
    %c0_i32 = arith.constant 0 : i32
    %c0_i32_0 = arith.constant 0 : i32
    %c0_i32_1 = arith.constant 0 : i32
    return %arg0, %c0_i32, %c0_i32_0 : i32, i32, i32
  }
  func.func @transform_13(%arg0: i32) -> (i32, i32, i32) {
    %c0_i32 = arith.constant 0 : i32
    %c0_i32_0 = arith.constant 0 : i32
    %c0_i32_1 = arith.constant 0 : i32
    return %arg0, %c0_i32, %c0_i32_0 : i32, i32, i32
  }
}

</mosaic_0001>

<llo_original>
// kernel: tpu_custom_call.1
$region0: #{tpu_custom_call.1}
  #allocation0 [shape = 'u32[]', space=smem, size = 0x4, offset = 0x4, fixed_abs, tag = 'smem constant byte address 0x4 - core index']
  #allocation1 [shape = 'u32[144,128]{1,0:T(1,128)}', space=vmem, size = 0x12000, scoped, tag = 'internal scratch']
  #allocation2 [shape = 'f32[1,1]{1,0:T(1,128)S(1)}', space=vmem, size = 0x200, scoped, tag = 'scoped memory for tpu_custom_call.1']
  %s0 = inlined_call_operand.vmem [shape: s32[2,40,1], index: 0, kind: input, shape index: {}]
  %s1 = inlined_call_operand.vmem [shape: s32[2,1,8], index: 1, kind: input, shape index: {}]
  %s2 = inlined_call_operand.vmem [shape: f32[2,1,128], index: 2, kind: input, shape index: {}]
  %s3 = inlined_call_operand.vmem [shape: bf16[100,32], index: 3, kind: input, shape index: {}]
  %s4 = inlined_call_operand.vmem [shape: bf16[32,50], index: 4, kind: input, shape index: {}]
  %s5 = inlined_call_operand.vmem [shape: f32[1,32], index: 5, kind: input, shape index: {}]
  %s6 = inlined_call_operand.vmem [shape: f32[1,32], index: 6, kind: input, shape index: {}]
  %s7 = inlined_call_operand.vmem [shape: f32[32,1], index: 7, kind: input, shape index: {}]
  %s8 = inlined_call_operand.vmem [shape: bf16[32,32], index: 8, kind: input, shape index: {}]
  %s9 = inlined_call_operand.vmem [shape: f32[1,32], index: 9, kind: input, shape index: {}]
  %s10 = inlined_call_operand.vmem [shape: bf16[32,1], index: 10, kind: input, shape index: {}]
  %s11 = inlined_call_operand.<no memory space> [shape: f32[1,1], index: 11, kind: input, shape index: {}]
  %s12 = inlined_call_operand.hbm [shape: f32[2,1,128], index: 12, kind: output, shape index: {0}]
  %s13 = inlined_call_operand.vmem [shape: f32[2,1,1], index: 13, kind: output, shape index: {1}]
  %14 = xla_tuple %s12, %s13
  %s15 = sld [smem:[#allocation0]]
  $region89: #{tpu_custom_call.1} parent=0
    _
  %s17 = ssub.s32 1, %s15
  %s18 = scalar_select 0, %s17, %s15
  %v19 = vstv %s11
  %20 = vst [vmem:[#allocation2] sm:$0x1] %v19
  $region1: #{tpu_custom_call.1} parent=0
    #allocation3 [shape = 'u8[1024]{0}', space=vmem, size = 0x400, scoped, tag = 'output window, operand 0']
    #allocation4 [shape = 's32[2]{0}', space=sflag, size = 0x8, scoped, tag = 'scoped memory for tpu_custom_call.1']
    %21 = vsyncpa [#allocation4], 0
    %s22 = scalar_lea.sflag [#allocation4], 1
    %23 = vsyncpa %s22, 0
    loop: start=0, step=1, limit=4
    $region2: #{tpu_custom_call.1} parent=1 // loop_pre_header
      _
    $region3: #{tpu_custom_call.1} parent=1 // loop_header
      %s25 = sphi 0, %s29
      %p26 = scmp.ge.s32.totalorder %s25, 4
      %s35 = sphi 0, %s37
      %s38 = sphi 0, %s35
      %s39 = sphi 0, %s38
      %s55 = sphi 0, %s39
      %s61 = sphi 0, %s63
      %s64 = sphi 0, %s61
      %s65 = sphi 0, %s64
      %s81 = sphi 0, %s65
      %s87 = sphi 0, %s89
      %s90 = sphi 0, %s87
      %s91 = sphi 0, %s90
      %s107 = sphi 0, %s91
      %s111 = sphi 0, %s111
      %s113 = sphi 0, %s111
      %s114 = sphi 0, %s113
      %s128 = sphi 0, %s114
      %s132 = sphi 0, %s132
      %s134 = sphi 0, %s132
      %s135 = sphi 0, %s134
      %s149 = sphi 0, %s135
      %s153 = sphi 0, %s153
      %s155 = sphi 0, %s153
      %s156 = sphi 0, %s155
      %s170 = sphi 0, %s156
      %s174 = sphi 0, %s174
      %s176 = sphi 0, %s174
      %s177 = sphi 0, %s176
      %s191 = sphi 0, %s177
      %s195 = sphi 0, %s195
      %s197 = sphi 0, %s195
      %s198 = sphi 0, %s197
      %s212 = sphi 0, %s198
      %s216 = sphi 0, %s216
      %s218 = sphi 0, %s216
      %s219 = sphi 0, %s218
      %s233 = sphi 0, %s219
      %s237 = sphi 0, %s237
      %s239 = sphi 0, %s237
      %s240 = sphi 0, %s239
      %s254 = sphi 0, %s240
      %s258 = sphi 0, %s258
      %s260 = sphi 0, %s258
      %s261 = sphi 0, %s260
      %s275 = sphi 0, %s261
      %s279 = sphi 0, %s279
      %s281 = sphi 0, %s279
      %s282 = sphi 0, %s281
      %s296 = sphi 0, %s282
      %s302 = sphi 0, %s304
      %s305 = sphi 0, %s302
      %s306 = sphi 0, %s305
      %s322 = sphi 0, %s306
      %s328 = sphi 0, %s330
      %s331 = sphi 0, %s328
      %s332 = sphi 0, %s331
      %s348 = sphi 0, %s332
    $region4: #{tpu_custom_call.1} parent=1 // loop_header_branch
      %28 = sbr.rel (%p26) target = $region8
    $region5: #{tpu_custom_call.1} parent=1 // loop_body
      %s30 = ssub.s32 %s25, 1
      %s31 = ssub.s32 %s25, 2
      %s32 = sadd.s32 %s25, 1
      %s33 = ssub.s32 %s25, %s32
      %p34 = scmp.eq.s32.totalorder %s33, 0
      %s36 = sadd.s32 %s35, 1
      %s37 = scalar_select %p34, %s35, %s36
      %p40 = pneg %p34
      %p41 = scmp.eq.s32.totalorder %s25, 1
      %p42 = por %p40, %p41
      %p43 = scmp.ne.s32.totalorder %s35, %s38
      %p44 = scmp.eq.s32.totalorder %s25, 0
      %p45 = por %p43, %p44
      %p46 = scmp.ne.s32.totalorder %s35, %s38
      %p47 = scmp.eq.s32.totalorder %s30, 1
      %p48 = por %p46, %p47
      %p49 = scmp.ne.s32.totalorder %s38, %s39
      %p50 = scmp.eq.s32.totalorder %s30, 0
      %p51 = por %p49, %p50
      %p52 = scmp.ne.s32.totalorder %s38, %s39
      %p53 = scmp.eq.s32.totalorder %s31, 1
      %p54 = por %p52, %p53
      %p56 = scmp.ne.s32.totalorder %s39, %s55
      %p57 = scmp.eq.s32.totalorder %s31, 0
      %p58 = por %p56, %p57
      %s59 = ssub.s32 %s25, %s32
      %p60 = scmp.eq.s32.totalorder %s59, 0
      %s62 = sadd.s32 %s61, 1
      %s63 = scalar_select %p60, %s61, %s62
      %p66 = pneg %p60
      %p67 = scmp.eq.s32.totalorder %s25, 1
      %p68 = por %p66, %p67
      %p69 = scmp.ne.s32.totalorder %s61, %s64
      %p70 = scmp.eq.s32.totalorder %s25, 0
      %p71 = por %p69, %p70
      %p72 = scmp.ne.s32.totalorder %s61, %s64
      %p73 = scmp.eq.s32.totalorder %s30, 1
      %p74 = por %p72, %p73
      %p75 = scmp.ne.s32.totalorder %s64, %s65
      %p76 = scmp.eq.s32.totalorder %s30, 0
      %p77 = por %p75, %p76
      %p78 = scmp.ne.s32.totalorder %s64, %s65
      %p79 = scmp.eq.s32.totalorder %s31, 1
      %p80 = por %p78, %p79
      %p82 = scmp.ne.s32.totalorder %s65, %s81
      %p83 = scmp.eq.s32.totalorder %s31, 0
      %p84 = por %p82, %p83
      %s85 = ssub.s32 %s25, %s32
      %p86 = scmp.eq.s32.totalorder %s85, 0
      %s88 = sadd.s32 %s87, 1
      %s89 = scalar_select %p86, %s87, %s88
      %p92 = pneg %p86
      %p93 = scmp.eq.s32.totalorder %s25, 1
      %p94 = por %p92, %p93
      %p95 = scmp.ne.s32.totalorder %s87, %s90
      %p96 = scmp.eq.s32.totalorder %s25, 0
      %p97 = por %p95, %p96
      %p98 = scmp.ne.s32.totalorder %s87, %s90
      %p99 = scmp.eq.s32.totalorder %s30, 1
      %p100 = por %p98, %p99
      %p101 = scmp.ne.s32.totalorder %s90, %s91
      %p102 = scmp.eq.s32.totalorder %s30, 0
      %p103 = por %p101, %p102
      %p104 = scmp.ne.s32.totalorder %s90, %s91
      %p105 = scmp.eq.s32.totalorder %s31, 1
      %p106 = por %p104, %p105
      %p108 = scmp.ne.s32.totalorder %s91, %s107
      %p109 = scmp.eq.s32.totalorder %s31, 0
      %p110 = por %p108, %p109
      %s112 = sadd.s32 %s111, 1
      %p115 = scmp.eq.s32.totalorder %s25, 1
      %p116 = scmp.ne.s32.totalorder %s111, %s113
      %p117 = scmp.eq.s32.totalorder %s25, 0
      %p118 = por %p116, %p117
      %p119 = scmp.ne.s32.totalorder %s111, %s113
      %p120 = scmp.eq.s32.totalorder %s30, 1
      %p121 = por %p119, %p120
      %p122 = scmp.ne.s32.totalorder %s113, %s114
      %p123 = scmp.eq.s32.totalorder %s30, 0
      %p124 = por %p122, %p123
      %p125 = scmp.ne.s32.totalorder %s113, %s114
      %p126 = scmp.eq.s32.totalorder %s31, 1
      %p127 = por %p125, %p126
      %p129 = scmp.ne.s32.totalorder %s114, %s128
      %p130 = scmp.eq.s32.totalorder %s31, 0
      %p131 = por %p129, %p130
      %s133 = sadd.s32 %s132, 1
      %p136 = scmp.eq.s32.totalorder %s25, 1
      %p137 = scmp.ne.s32.totalorder %s132, %s134
      %p138 = scmp.eq.s32.totalorder %s25, 0
      %p139 = por %p137, %p138
      %p140 = scmp.ne.s32.totalorder %s132, %s134
      %p141 = scmp.eq.s32.totalorder %s30, 1
      %p142 = por %p140, %p141
      %p143 = scmp.ne.s32.totalorder %s134, %s135
      %p144 = scmp.eq.s32.totalorder %s30, 0
      %p145 = por %p143, %p144
      %p146 = scmp.ne.s32.totalorder %s134, %s135
      %p147 = scmp.eq.s32.totalorder %s31, 1
      %p148 = por %p146, %p147
      %p150 = scmp.ne.s32.totalorder %s135, %s149
      %p151 = scmp.eq.s32.totalorder %s31, 0
      %p152 = por %p150, %p151
      %s154 = sadd.s32 %s153, 1
      %p157 = scmp.eq.s32.totalorder %s25, 1
      %p158 = scmp.ne.s32.totalorder %s153, %s155
      %p159 = scmp.eq.s32.totalorder %s25, 0
      %p160 = por %p158, %p159
      %p161 = scmp.ne.s32.totalorder %s153, %s155
      %p162 = scmp.eq.s32.totalorder %s30, 1
      %p163 = por %p161, %p162
      %p164 = scmp.ne.s32.totalorder %s155, %s156
      %p165 = scmp.eq.s32.totalorder %s30, 0
      %p166 = por %p164, %p165
      %p167 = scmp.ne.s32.totalorder %s155, %s156
      %p168 = scmp.eq.s32.totalorder %s31, 1
      %p169 = por %p167, %p168
      %p171 = scmp.ne.s32.totalorder %s156, %s170
      %p172 = scmp.eq.s32.totalorder %s31, 0
      %p173 = por %p171, %p172
      %s175 = sadd.s32 %s174, 1
      %p178 = scmp.eq.s32.totalorder %s25, 1
      %p179 = scmp.ne.s32.totalorder %s174, %s176
      %p180 = scmp.eq.s32.totalorder %s25, 0
      %p181 = por %p179, %p180
      %p182 = scmp.ne.s32.totalorder %s174, %s176
      %p183 = scmp.eq.s32.totalorder %s30, 1
      %p184 = por %p182, %p183
      %p185 = scmp.ne.s32.totalorder %s176, %s177
      %p186 = scmp.eq.s32.totalorder %s30, 0
      %p187 = por %p185, %p186
      %p188 = scmp.ne.s32.totalorder %s176, %s177
      %p189 = scmp.eq.s32.totalorder %s31, 1
      %p190 = por %p188, %p189
      %p192 = scmp.ne.s32.totalorder %s177, %s191
      %p193 = scmp.eq.s32.totalorder %s31, 0
      %p194 = por %p192, %p193
      %s196 = sadd.s32 %s195, 1
      %p199 = scmp.eq.s32.totalorder %s25, 1
      %p200 = scmp.ne.s32.totalorder %s195, %s197
      %p201 = scmp.eq.s32.totalorder %s25, 0
      %p202 = por %p200, %p201
      %p203 = scmp.ne.s32.totalorder %s195, %s197
      %p204 = scmp.eq.s32.totalorder %s30, 1
      %p205 = por %p203, %p204
      %p206 = scmp.ne.s32.totalorder %s197, %s198
      %p207 = scmp.eq.s32.totalorder %s30, 0
      %p208 = por %p206, %p207
      %p209 = scmp.ne.s32.totalorder %s197, %s198
      %p210 = scmp.eq.s32.totalorder %s31, 1
      %p211 = por %p209, %p210
      %p213 = scmp.ne.s32.totalorder %s198, %s212
      %p214 = scmp.eq.s32.totalorder %s31, 0
      %p215 = por %p213, %p214
      %s217 = sadd.s32 %s216, 1
      %p220 = scmp.eq.s32.totalorder %s25, 1
      %p221 = scmp.ne.s32.totalorder %s216, %s218
      %p222 = scmp.eq.s32.totalorder %s25, 0
      %p223 = por %p221, %p222
      %p224 = scmp.ne.s32.totalorder %s216, %s218
      %p225 = scmp.eq.s32.totalorder %s30, 1
      %p226 = por %p224, %p225
      %p227 = scmp.ne.s32.totalorder %s218, %s219
      %p228 = scmp.eq.s32.totalorder %s30, 0
      %p229 = por %p227, %p228
      %p230 = scmp.ne.s32.totalorder %s218, %s219
      %p231 = scmp.eq.s32.totalorder %s31, 1
      %p232 = por %p230, %p231
      %p234 = scmp.ne.s32.totalorder %s219, %s233
      %p235 = scmp.eq.s32.totalorder %s31, 0
      %p236 = por %p234, %p235
      %s238 = sadd.s32 %s237, 1
      %p241 = scmp.eq.s32.totalorder %s25, 1
      %p242 = scmp.ne.s32.totalorder %s237, %s239
      %p243 = scmp.eq.s32.totalorder %s25, 0
      %p244 = por %p242, %p243
      %p245 = scmp.ne.s32.totalorder %s237, %s239
      %p246 = scmp.eq.s32.totalorder %s30, 1
      %p247 = por %p245, %p246
      %p248 = scmp.ne.s32.totalorder %s239, %s240
      %p249 = scmp.eq.s32.totalorder %s30, 0
      %p250 = por %p248, %p249
      %p251 = scmp.ne.s32.totalorder %s239, %s240
      %p252 = scmp.eq.s32.totalorder %s31, 1
      %p253 = por %p251, %p252
      %p255 = scmp.ne.s32.totalorder %s240, %s254
      %p256 = scmp.eq.s32.totalorder %s31, 0
      %p257 = por %p255, %p256
      %s259 = sadd.s32 %s258, 1
      %p262 = scmp.eq.s32.totalorder %s25, 1
      %p263 = scmp.ne.s32.totalorder %s258, %s260
      %p264 = scmp.eq.s32.totalorder %s25, 0
      %p265 = por %p263, %p264
      %p266 = scmp.ne.s32.totalorder %s258, %s260
      %p267 = scmp.eq.s32.totalorder %s30, 1
      %p268 = por %p266, %p267
      %p269 = scmp.ne.s32.totalorder %s260, %s261
      %p270 = scmp.eq.s32.totalorder %s30, 0
      %p271 = por %p269, %p270
      %p272 = scmp.ne.s32.totalorder %s260, %s261
      %p273 = scmp.eq.s32.totalorder %s31, 1
      %p274 = por %p272, %p273
      %p276 = scmp.ne.s32.totalorder %s261, %s275
      %p277 = scmp.eq.s32.totalorder %s31, 0
      %p278 = por %p276, %p277
      %s280 = sadd.s32 %s279, 1
      %p283 = scmp.eq.s32.totalorder %s25, 1
      %p284 = scmp.ne.s32.totalorder %s279, %s281
      %p285 = scmp.eq.s32.totalorder %s25, 0
      %p286 = por %p284, %p285
      %p287 = scmp.ne.s32.totalorder %s279, %s281
      %p288 = scmp.eq.s32.totalorder %s30, 1
      %p289 = por %p287, %p288
      %p290 = scmp.ne.s32.totalorder %s281, %s282
      %p291 = scmp.eq.s32.totalorder %s30, 0
      %p292 = por %p290, %p291
      %p293 = scmp.ne.s32.totalorder %s281, %s282
      %p294 = scmp.eq.s32.totalorder %s31, 1
      %p295 = por %p293, %p294
      %p297 = scmp.ne.s32.totalorder %s282, %s296
      %p298 = scmp.eq.s32.totalorder %s31, 0
      %p299 = por %p297, %p298
      %s300 = ssub.s32 %s25, %s32
      %p301 = scmp.eq.s32.totalorder %s300, 0
      %s303 = sadd.s32 %s302, 1
      %s304 = scalar_select %p301, %s302, %s303
      %p307 = pneg %p301
      %p308 = scmp.eq.s32.totalorder %s25, 1
      %p309 = por %p307, %p308
      %p310 = scmp.ne.s32.totalorder %s302, %s305
      %p311 = scmp.eq.s32.totalorder %s25, 0
      %p312 = por %p310, %p311
      %p313 = scmp.ne.s32.totalorder %s302, %s305
      %p314 = scmp.eq.s32.totalorder %s30, 1
      %p315 = por %p313, %p314
      %p316 = scmp.ne.s32.totalorder %s305, %s306
      %p317 = scmp.eq.s32.totalorder %s30, 0
      %p318 = por %p316, %p317
      %p319 = scmp.ne.s32.totalorder %s305, %s306
      %p320 = scmp.eq.s32.totalorder %s31, 1
      %p321 = por %p319, %p320
      %p323 = scmp.ne.s32.totalorder %s306, %s322
      %p324 = scmp.eq.s32.totalorder %s31, 0
      %p325 = por %p323, %p324
      %s326 = ssub.s32 %s25, %s32
      %p327 = scmp.eq.s32.totalorder %s326, 0
      %s329 = sadd.s32 %s328, 1
      %s330 = scalar_select %p327, %s328, %s329
      %p333 = pneg %p327
      %p334 = scmp.eq.s32.totalorder %s25, 1
      %p335 = por %p333, %p334
      %p336 = scmp.ne.s32.totalorder %s328, %s331
      %p337 = scmp.eq.s32.totalorder %s25, 0
      %p338 = por %p336, %p337
      %p339 = scmp.ne.s32.totalorder %s328, %s331
      %p340 = scmp.eq.s32.totalorder %s30, 1
      %p341 = por %p339, %p340
      %p342 = scmp.ne.s32.totalorder %s331, %s332
      %p343 = scmp.eq.s32.totalorder %s30, 0
      %p344 = por %p342, %p343
      %p345 = scmp.ne.s32.totalorder %s331, %s332
      %p346 = scmp.eq.s32.totalorder %s31, 1
      %p347 = por %p345, %p346
      %p349 = scmp.ne.s32.totalorder %s332, %s348
      %p350 = scmp.eq.s32.totalorder %s31, 0
      %p351 = por %p349, %p350
      %p352 = scmp.le.s32.totalorder 1, %s25
      %p353 = scmp.lt.s32.totalorder %s25, 3
      %p354 = pnand %p352, %p353
      %p355 = pneg %p354
      // Predicated region
      $region9: #{tpu_custom_call.1} parent=5 // pred_check
        _
      $region10: #{tpu_custom_call.1} parent=5 // pred_check_branch
        %357 = sbr.rel (%p354) target = $region12
      $region11: #{tpu_custom_call.1} parent=5 // pred_region
        %s358 = ssub.s32 %s25, 1
        // Predicated region
        $region13: #{tpu_custom_call.1} parent=11 // pred_check
          %p359 = pneg %p124
        $region14: #{tpu_custom_call.1} parent=11 // pred_check_branch
          %361 = sbr.rel (%p359) target = $region16
        $region15: #{tpu_custom_call.1} parent=11 // pred_region
          _
        $region16: #{tpu_custom_call.1} parent=11 // pred_fallthru
          _
        // Predicated region
        $region17: #{tpu_custom_call.1} parent=11 // pred_check
          %p362 = pneg %p145
        $region18: #{tpu_custom_call.1} parent=11 // pred_check_branch
          %364 = sbr.rel (%p362) target = $region20
        $region19: #{tpu_custom_call.1} parent=11 // pred_region
          _
        $region20: #{tpu_custom_call.1} parent=11 // pred_fallthru
          _
        // Predicated region
        $region21: #{tpu_custom_call.1} parent=11 // pred_check
          %p365 = pneg %p166
        $region22: #{tpu_custom_call.1} parent=11 // pred_check_branch
          %367 = sbr.rel (%p365) target = $region24
        $region23: #{tpu_custom_call.1} parent=11 // pred_region
          _
        $region24: #{tpu_custom_call.1} parent=11 // pred_fallthru
          _
        // Predicated region
        $region25: #{tpu_custom_call.1} parent=11 // pred_check
          %p368 = pneg %p187
        $region26: #{tpu_custom_call.1} parent=11 // pred_check_branch
          %370 = sbr.rel (%p368) target = $region28
        $region27: #{tpu_custom_call.1} parent=11 // pred_region
          _
        $region28: #{tpu_custom_call.1} parent=11 // pred_fallthru
          _
        // Predicated region
        $region29: #{tpu_custom_call.1} parent=11 // pred_check
          %p371 = pneg %p208
        $region30: #{tpu_custom_call.1} parent=11 // pred_check_branch
          %373 = sbr.rel (%p371) target = $region32
        $region31: #{tpu_custom_call.1} parent=11 // pred_region
          _
        $region32: #{tpu_custom_call.1} parent=11 // pred_fallthru
          _
        // Predicated region
        $region33: #{tpu_custom_call.1} parent=11 // pred_check
          %p374 = pneg %p229
        $region34: #{tpu_custom_call.1} parent=11 // pred_check_branch
          %376 = sbr.rel (%p374) target = $region36
        $region35: #{tpu_custom_call.1} parent=11 // pred_region
          _
        $region36: #{tpu_custom_call.1} parent=11 // pred_fallthru
          _
        // Predicated region
        $region37: #{tpu_custom_call.1} parent=11 // pred_check
          %p377 = pneg %p250
        $region38: #{tpu_custom_call.1} parent=11 // pred_check_branch
          %379 = sbr.rel (%p377) target = $region40
        $region39: #{tpu_custom_call.1} parent=11 // pred_region
          _
        $region40: #{tpu_custom_call.1} parent=11 // pred_fallthru
          _
        // Predicated region
        $region41: #{tpu_custom_call.1} parent=11 // pred_check
          %p380 = pneg %p271
        $region42: #{tpu_custom_call.1} parent=11 // pred_check_branch
          %382 = sbr.rel (%p380) target = $region44
        $region43: #{tpu_custom_call.1} parent=11 // pred_region
          _
        $region44: #{tpu_custom_call.1} parent=11 // pred_fallthru
          _
        // Predicated region
        $region45: #{tpu_custom_call.1} parent=11 // pred_check
          %p383 = pneg %p292
        $region46: #{tpu_custom_call.1} parent=11 // pred_check_branch
          %385 = sbr.rel (%p383) target = $region48
        $region47: #{tpu_custom_call.1} parent=11 // pred_region
          _
        $region48: #{tpu_custom_call.1} parent=11 // pred_fallthru
          _
      $region12: #{tpu_custom_call.1} parent=5 // pred_fallthru
        _
      %p386 = scmp.lt.s32.totalorder %s25, 2
      // Predicated region
      $region49: #{tpu_custom_call.1} parent=5 // pred_check
        %p387 = pneg %p386
      $region50: #{tpu_custom_call.1} parent=5 // pred_check_branch
        %389 = sbr.rel (%p387) target = $region52
      $region51: #{tpu_custom_call.1} parent=5 // pred_region
        // Predicated region
        $region53: #{tpu_custom_call.1} parent=51 // pred_check
          %p390 = pneg %p45
        $region54: #{tpu_custom_call.1} parent=51 // pred_check_branch
          %392 = sbr.rel (%p390) target = $region56
        $region55: #{tpu_custom_call.1} parent=51 // pred_region
          %p393 = scmp.lt.s32.totalorder %s25, 1
          %s394 = scalar_select %p393, %s25, 1
          %s395 = smul.addr %s394, 5
          %s396 = smul.addr %s395, 8
          %s397 = scalar_lea.vmem %s0, %s396
        $region56: #{tpu_custom_call.1} parent=51 // pred_fallthru
          _
        // Predicated region
        $region57: #{tpu_custom_call.1} parent=51 // pred_check
          %p398 = pneg %p71
        $region58: #{tpu_custom_call.1} parent=51 // pred_check_branch
          %400 = sbr.rel (%p398) target = $region60
        $region59: #{tpu_custom_call.1} parent=51 // pred_region
          %p401 = scmp.lt.s32.totalorder %s25, 1
          %s402 = scalar_select %p401, %s25, 1
          %s403 = scalar_lea.vmem %s1, %s402
        $region60: #{tpu_custom_call.1} parent=51 // pred_fallthru
          _
        // Predicated region
        $region61: #{tpu_custom_call.1} parent=51 // pred_check
          %p404 = pneg %p97
        $region62: #{tpu_custom_call.1} parent=51 // pred_check_branch
          %406 = sbr.rel (%p404) target = $region64
        $region63: #{tpu_custom_call.1} parent=51 // pred_region
          %p407 = scmp.lt.s32.totalorder %s25, 1
          %s408 = scalar_select %p407, %s25, 1
          %s409 = scalar_lea.vmem %s2, %s408
        $region64: #{tpu_custom_call.1} parent=51 // pred_fallthru
          _
      $region52: #{tpu_custom_call.1} parent=5 // pred_fallthru
        _
      %p410 = scmp.le.s32.totalorder 1, %s25
      %p411 = scmp.lt.s32.totalorder %s25, 3
      %p412 = pnand %p410, %p411
      %p413 = pneg %p412
      // Predicated region
      $region65: #{tpu_custom_call.1} parent=5 // pred_check
        _
      $region66: #{tpu_custom_call.1} parent=5 // pred_check_branch
        %415 = sbr.rel (%p412) target = $region68
      $region67: #{tpu_custom_call.1} parent=5 // pred_region
        %s416 = ssub.s32 %s25, 1
        %p417 = scmp.lt.s32.totalorder %s30, 1
        %s418 = scalar_select %p417, %s30, 1
        %s419 = smul.addr %s418, 5
        %s420 = smul.addr %s419, 8
        %s421 = scalar_lea.vmem %s0, %s420
        %p422 = pneg %p51
        %p423 = pneg %p48
        %p424 = scmp.lt.s32.totalorder %s30, 1
        %s425 = scalar_select %p424, %s30, 1
        %s426 = scalar_lea.vmem %s1, %s425
        %p427 = pneg %p77
        %p428 = pneg %p74
        %p429 = scmp.lt.s32.totalorder %s30, 1
        %s430 = scalar_select %p429, %s30, 1
        %s431 = scalar_lea.vmem %s2, %s430
        %p432 = pneg %p103
        %p433 = pneg %p100
        %p434 = pneg %p124
        %p435 = pneg %p121
        %p436 = pneg %p145
        %p437 = pneg %p142
        %p438 = pneg %p166
        %p439 = pneg %p163
        %p440 = pneg %p187
        %p441 = pneg %p184
        %p442 = pneg %p208
        %p443 = pneg %p205
        %p444 = pneg %p229
        %p445 = pneg %p226
        %p446 = pneg %p250
        %p447 = pneg %p247
        %p448 = pneg %p271
        %p449 = pneg %p268
        %p450 = pneg %p292
        %p451 = pneg %p289
        %p452 = pneg %p318
        %p453 = pneg %p315
        %s454 = sand.u32 %s305, 1
        %s455 = scalar_lea.sflag [#allocation4], %s454
        %s456 = sand.u32 %s305, 1
        %s457 = scalar_lea.vmem [#allocation3], %s456
        %p458 = pneg %p344
        %p459 = pneg %p341
        %p460 = scmp.lt.s32.totalorder %s30, 1
        %s461 = scalar_select %p460, %s30, 1
        %s462 = scalar_lea.vmem %s13, %s461
        %p463 = scmp.lt.s32.totalorder %s30, 1
        %s464 = scalar_select %p463, %s30, 1
        %s465 = smul.addr %s464, 5
        %s466 = smul.addr %s465, 8
        %s467 = scalar_lea.vmem %s0, %s466
        %p468 = scmp.lt.s32.totalorder %s30, 1
        %s469 = scalar_select %p468, %s30, 1
        %s470 = scalar_lea.vmem %s1, %s469
        %p471 = scmp.lt.s32.totalorder %s30, 1
        %s472 = scalar_select %p471, %s30, 1
        %s473 = scalar_lea.vmem %s2, %s472
        %p474 = scmp.lt.s32.totalorder %s30, 1
        %s475 = scalar_select %p474, %s30, 1
        %s476 = scalar_lea.vmem %s13, %s475
        %v478 = vld [vmem:[%s467] sm:$0xff]
        %v479 = vld [vmem:[%s467 + $0x8] sm:$0xff]
        %v480 = vld [vmem:[%s467 + $0x10] sm:$0xff]
        %v481 = vld [vmem:[%s467 + $0x18] sm:$0xff]
        %v482 = vld [vmem:[%s467 + $0x20] sm:$0xff]
        %v483 = vld [vmem:[%s470] sm:$0x1]
        %v484 = vld [vmem:[%s473] sm:$0x1]
        %vm485 = vcmp.ne.s32.totalorder %v478, 0
        %vm486 = vcmp.ne.s32.totalorder %v479, 0
        %vm487 = vcmp.ne.s32.totalorder %v480, 0
        %vm488 = vcmp.ne.s32.totalorder %v481, 0
        %vm489 = vcmp.ne.s32.totalorder %v482, 0
        %vm490 = vcmp.ne.s32.totalorder %v478, 50
        %vm491 = vcmp.ne.s32.totalorder %v479, 50
        %vm492 = vcmp.ne.s32.totalorder %v480, 50
        %vm493 = vcmp.ne.s32.totalorder %v481, 50
        %vm494 = vcmp.ne.s32.totalorder %v482, 50
        %vm495 = vmand %vm485, %vm490
        %vm496 = vmand %vm486, %vm491
        %vm497 = vmand %vm487, %vm492
        %vm498 = vmand %vm488, %vm493
        %vm499 = vmand %vm489, %vm494
        %v500 = vsel %vm495, 1, 0
        %v501 = vsel %vm496, 1, 0
        %v502 = vsel %vm497, 1, 0
        %v503 = vsel %vm498, 1, 0
        %v504 = vsel %vm499, 1, 0
        %v505 = vcvt.s32.f32 %v500
        %v506 = vcvt.s32.f32 %v501
        %v507 = vcvt.s32.f32 %v502
        %v508 = vcvt.s32.f32 %v503
        %v509 = vcvt.s32.f32 %v504
        %vm510 = vcmp.ne.s32.totalorder %v483, 0
        %v511 = vlaneseq
        %v512 = vand.u32 %v511, 127
        %513 = vset.pattern.permute.xlu0 0
        %514 = vperm.xlu0 %513, %v478
        %v515 = vpop.permute.xlu0 %514
        %516 = vset.pattern.permute.xlu0 0
        %517 = vperm.xlu0 %516, %v479
        %v518 = vpop.permute.xlu0 %517
        %519 = vset.pattern.permute.xlu0 0
        %520 = vperm.xlu0 %519, %v480
        %v521 = vpop.permute.xlu0 %520
        %522 = vset.pattern.permute.xlu0 0
        %523 = vperm.xlu0 %522, %v481
        %v524 = vpop.permute.xlu0 %523
        %525 = vset.pattern.permute.xlu0 0
        %526 = vperm.xlu0 %525, %v482
        %v527 = vpop.permute.xlu0 %526
        %vm528 = vcmp.eq.s32.totalorder %v515, %v512
        %vm529 = vcmp.eq.s32.totalorder %v518, %v512
        %vm530 = vcmp.eq.s32.totalorder %v521, %v512
        %vm531 = vcmp.eq.s32.totalorder %v524, %v512
        %vm532 = vcmp.eq.s32.totalorder %v527, %v512
        %v533 = vsel %vm528, 1, 0
        %v534 = vsel %vm529, 1, 0
        %v535 = vsel %vm530, 1, 0
        %v536 = vsel %vm531, 1, 0
        %v537 = vsel %vm532, 1, 0
        %v538 = vcvt.s32.f32 %v533
        %v539 = vcvt.s32.f32 %v534
        %v540 = vcvt.s32.f32 %v535
        %v541 = vcvt.s32.f32 %v536
        %v542 = vcvt.s32.f32 %v537
        %v543 = vpack.c.bf16 %v539, %v538
        %v544 = vpack.c.bf16 %v541, %v540
        %v545 = vpack.c.bf16 %v542, %v542
        %v546 = vld [vmem:[%s3] sm:$0xf]
        %v547 = vld [vmem:[%s3 + $0x4] sm:$0xf]
        %v548 = vld [vmem:[%s3 + $0x8] sm:$0xf]
        %v549 = vld [vmem:[%s3 + $0xc] sm:$0xf]
        %v550 = vld [vmem:[%s3 + $0x10] sm:$0xf]
        %v551 = vld [vmem:[%s3 + $0x14] sm:$0xf]
        %v552 = vld [vmem:[%s3 + $0x18] sm:$0xf]
        %v553 = vld [vmem:[%s3 + $0x1c] sm:$0xf]
        %v554 = vld [vmem:[%s3 + $0x20] sm:$0xf]
        %v555 = vld [vmem:[%s3 + $0x24] sm:$0xf]
        %v556 = vld [vmem:[%s3 + $0x28] sm:$0xf]
        %v557 = vld [vmem:[%s3 + $0x2c] sm:$0xf]
        %v558 = vld [vmem:[%s3 + $0x30] sm:$0x3]
        %v572 = vunpack.c.l.b16 %v546
        %v573 = vunpack.c.l.b16 %v547
        %v574 = vunpack.c.l.b16 %v548
        %v575 = vunpack.c.l.b16 %v549
        %v576 = vunpack.c.l.b16 %v550
        %v577 = vunpack.c.l.b16 %v551
        %v578 = vunpack.c.l.b16 %v552
        %v579 = vunpack.c.l.b16 %v553
        %v580 = vunpack.c.l.b16 %v554
        %v581 = vunpack.c.l.b16 %v555
        %v582 = vunpack.c.l.b16 %v556
        %v583 = vunpack.c.l.b16 %v557
        %v584 = vunpack.c.l.b16 %v558
        %v585 = vpack.c.b16 %v573, %v572
        %v586 = vpack.c.b16 %v575, %v574
        %v587 = vpack.c.b16 %v577, %v576
        %v588 = vpack.c.b16 %v579, %v578
        %v589 = vpack.c.b16 %v581, %v580
        %v590 = vpack.c.b16 %v583, %v582
        %v591 = vpack.c.b16 %v584, %v584
        %vm598 = vcmask 818176
        %v600 = vsel %vm598, %v543, 0
        %v603 = vsel %vm598, %v544, 0
        %v606 = vsel %vm598, %v545, 0
        %vm608 = vcmask 1041408
        %v610 = vsel %vm608, %v591, 0
        %612 = vmatprep.subr.bf16.mxu0 0
        %613 = vmatpush1.bf16.msra.mxu0 %v585
        %614 = vmatprep.subr.bf16.mxu0 0
        %615 = vmatpush1.bf16.msra.mxu0 %v586
        %616 = vmatprep.subr.bf16.mxu0 0
        %617 = vmatpush1.bf16.msra.mxu0 %v587
        %618 = vmatprep.subr.bf16.mxu0 0
        %619 = vmatpush1.bf16.msra.mxu0 %v588
        %620 = vmatprep.subr.bf16.mxu0 0
        %621 = vmatpush1.bf16.msra.mxu0 %v589
        %622 = vmatprep.subr.bf16.mxu0 0
        %623 = vmatpush1.bf16.msra.mxu0 %v590
        %624 = vmatprep.subr.bf16.mxu0 0
        %625 = vmatpush1.bf16.msra.mxu0 %v610
        %626 = vmatprep.subr.bf16.mxu0 0
        %627 = vmatpush1.bf16.msra.mxu0 0
        %628 = vmatprep.subr.bf16.mxu0 0
        %629 = vmatpush1.bf16.msra.mxu0 0
        %630 = vmatprep.subr.bf16.mxu0 0
        %631 = vmatpush1.bf16.msra.mxu0 0
        %632 = vmatprep.subr.bf16.mxu0 0
        %633 = vmatpush1.bf16.msra.mxu0 0
        %634 = vmatprep.subr.bf16.mxu0 0
        %635 = vmatpush1.bf16.msra.mxu0 0
        %636 = vmatprep.subr.bf16.mxu0 0
        %637 = vmatpush1.bf16.msra.mxu0 0
        %638 = vmatprep.subr.bf16.mxu0 0
        %639 = vmatpush1.bf16.msra.mxu0 0
        %640 = vmatprep.subr.bf16.mxu0 0
        %641 = vmatpush1.bf16.msra.mxu0 0
        %642 = vmatprep.subr.bf16.mxu0 0
        %643 = vmatpush1.bf16.msra.mxu0 0
        %644 = vmatprep.mubr.bf16.mxu0 0
        %645 = vmatmul.mubr.bf16.gmra.mrb[0].mxu0 %v600
        %v646 = vpop.f32.mrb[0].mxu0
        %v647 = vadd.f32 0.0, %v646
        %v648 = vpop.f32.mrb[0].mxu0
        %v649 = vpop.f32.mrb[0].mxu0
        %v650 = vadd.f32 0.0, %v649
        %v651 = vpop.f32.mrb[0].mxu0
        %652 = vmatprep.mubr.bf16.mxu0 0
        %653 = vmatmul.mubr.bf16.gmra.mrb[0].mxu0 %v603
        %v654 = vpop.f32.mrb[0].mxu0
        %v655 = vadd.f32 0.0, %v654
        %v656 = vpop.f32.mrb[0].mxu0
        %v657 = vpop.f32.mrb[0].mxu0
        %v658 = vadd.f32 0.0, %v657
        %v659 = vpop.f32.mrb[0].mxu0
        %660 = vmatprep.mubr.bf16.mxu0 0
        %661 = vmatmul.mubr.bf16.gmra.mrb[0].mxu0 %v606
        %v662 = vpop.f32.mrb[0].mxu0
        %v663 = vadd.f32 0.0, %v662
        %v664 = vpop.f32.mrb[0].mxu0
        %v665 = vpop.f32.mrb[0].mxu0
        %v666 = vpop.f32.mrb[0].mxu0
        %667 = vdwg.mxu0
        %v668 = vld [vmem:[%s5] sm:$0x1]
        %v670 = vlaneseq
        %v671 = vshrl.u32 %v670, 7
        %v672 = vsub.s32 0, %v671
        %v673 = vrot.slane %v668, %v672
        %v675 = vadd.f32 %v647, %v673
        %v676 = vtanh.pop %v675
        %678 = vset.pattern.permute.xlu0 0
        %679 = vperm.xlu0 %678, %v505
        %v680 = vpop.permute.xlu0 %679
        %v682 = vmul.f32 %v676, %v680
        %v683 = vld [vmem:[%s6] sm:$0x1]
        %v685 = vlaneseq
        %v686 = vshrl.u32 %v685, 7
        %v687 = vsub.s32 0, %v686
        %v688 = vrot.slane %v683, %v687
        %v690 = vadd.f32 %v650, %v688
        %v691 = vadd.f32 %v655, %v688
        %v692 = vadd.f32 %v658, %v688
        %v693 = vadd.f32 %v663, %v688
        %v694 = vtanh.pop %v690
        %v695 = vtanh.pop %v691
        %v696 = vtanh.pop %v692
        %v697 = vtanh.pop %v693
        %699 = vset.pattern.permute.xlu0 0
        %700 = vperm.xlu0 %699, %v506
        %v701 = vpop.permute.xlu0 %700
        %704 = vset.pattern.permute.xlu0 0
        %705 = vperm.xlu0 %704, %v507
        %v706 = vpop.permute.xlu0 %705
        %709 = vset.pattern.permute.xlu0 0
        %710 = vperm.xlu0 %709, %v508
        %v711 = vpop.permute.xlu0 %710
        %714 = vset.pattern.permute.xlu0 0
        %715 = vperm.xlu0 %714, %v509
        %v716 = vpop.permute.xlu0 %715
        %v718 = vmul.f32 %v694, %v701
        %v719 = vmul.f32 %v695, %v706
        %v720 = vmul.f32 %v696, %v711
        %v721 = vmul.f32 %v697, %v716
        %v722 = vlaneseq
        %v723 = vshrl.u32 %v722, 7
        %v724 = vadd.s32 %v723, 8
        %v725 = vadd.s32 %v723, 16
        %v726 = vadd.s32 %v723, 24
        %v727 = vadd.s32 %v723, 32
        %v728 = vadd.s32 %v723, 40
        %v729 = vadd.s32 %v723, 48
        %v730 = vlaneseq
        %v731 = vshrl.u32 %v730, 7
        %v732 = vsub.s32 0, %v731
        %v733 = vrot.slane %v483, %v732
        %vm734 = vcmp.eq.s32.totalorder %v723, %v733
        %vm735 = vcmp.eq.s32.totalorder %v724, %v733
        %vm736 = vcmp.eq.s32.totalorder %v725, %v733
        %vm737 = vcmp.eq.s32.totalorder %v726, %v733
        %vm738 = vcmp.eq.s32.totalorder %v727, %v733
        %vm739 = vcmp.eq.s32.totalorder %v728, %v733
        %vm740 = vcmp.eq.s32.totalorder %v729, %v733
        %v741 = vsel %vm734, 1, 0
        %v742 = vsel %vm735, 1, 0
        %v743 = vsel %vm736, 1, 0
        %v744 = vsel %vm737, 1, 0
        %v745 = vsel %vm738, 1, 0
        %v746 = vsel %vm739, 1, 0
        %v747 = vsel %vm740, 1, 0
        %v748 = vcvt.s32.f32 %v741
        %v749 = vcvt.s32.f32 %v742
        %v750 = vcvt.s32.f32 %v743
        %v751 = vcvt.s32.f32 %v744
        %v752 = vcvt.s32.f32 %v745
        %v753 = vcvt.s32.f32 %v746
        %v754 = vcvt.s32.f32 %v747
        %v755 = vpack.c.bf16 %v749, %v748
        %v756 = vpack.c.bf16 %v751, %v750
        %v757 = vpack.c.bf16 %v753, %v752
        %v758 = vpack.c.bf16 %v754, %v754
        %v759 = vld [vmem:[%s4] sm:$0xf]
        %v760 = vld [vmem:[%s4 + $0x4] sm:$0xf]
        %v761 = vld [vmem:[%s4 + $0x8] sm:$0xf]
        %v762 = vld [vmem:[%s4 + $0xc] sm:$0xf]
        %v763 = vld [vmem:[%s7] sm:$0xff]
        %v764 = vld [vmem:[%s7 + $0x8] sm:$0xff]
        %v765 = vld [vmem:[%s7 + $0x10] sm:$0xff]
        %v766 = vld [vmem:[%s7 + $0x18] sm:$0xff]
        %768 = vset.pattern.permute.xlu0 0
        %769 = vperm.xlu0 %768, %v763
        %v770 = vpop.permute.xlu0 %769
        %773 = vset.pattern.permute.xlu0 0
        %774 = vperm.xlu0 %773, %v764
        %v775 = vpop.permute.xlu0 %774
        %778 = vset.pattern.permute.xlu0 0
        %779 = vperm.xlu0 %778, %v765
        %v780 = vpop.permute.xlu0 %779
        %783 = vset.pattern.permute.xlu0 0
        %784 = vperm.xlu0 %783, %v766
        %v785 = vpop.permute.xlu0 %784
        %v791 = vunpack.c.l.b16 %v759
        %v792 = vunpack.c.l.b16 %v760
        %v793 = vunpack.c.l.b16 %v761
        %v794 = vunpack.c.l.b16 %v762
        %v795 = vpack.c.b16 %v792, %v791
        %v796 = vpack.c.b16 %v794, %v793
        %vm797 = vcmask 408576
        %v799 = vsel %vm797, %v795, 0
        %v802 = vsel %vm797, %v796, 0
        %vm804 = vcmask 1040384
        %v806 = vsel %vm804, %v758, 0
        %808 = vmatprep.subr.bf16.mxu0 0
        %809 = vmatpush1.bf16.msra.mxu0 %v755
        %810 = vmatprep.subr.bf16.mxu0 0
        %811 = vmatpush1.bf16.msra.mxu0 %v756
        %812 = vmatprep.subr.bf16.mxu0 0
        %813 = vmatpush1.bf16.msra.mxu0 %v757
        %814 = vmatprep.subr.bf16.mxu0 0
        %815 = vmatpush1.bf16.msra.mxu0 %v806
        %816 = vmatprep.subr.bf16.mxu0 0
        %817 = vmatpush1.bf16.msra.mxu0 0
        %818 = vmatprep.subr.bf16.mxu0 0
        %819 = vmatpush1.bf16.msra.mxu0 0
        %820 = vmatprep.subr.bf16.mxu0 0
        %821 = vmatpush1.bf16.msra.mxu0 0
        %822 = vmatprep.subr.bf16.mxu0 0
        %823 = vmatpush1.bf16.msra.mxu0 0
        %824 = vmatprep.subr.bf16.mxu0 0
        %825 = vmatpush1.bf16.msra.mxu0 0
        %826 = vmatprep.subr.bf16.mxu0 0
        %827 = vmatpush1.bf16.msra.mxu0 0
        %828 = vmatprep.subr.bf16.mxu0 0
        %829 = vmatpush1.bf16.msra.mxu0 0
        %830 = vmatprep.subr.bf16.mxu0 0
        %831 = vmatpush1.bf16.msra.mxu0 0
        %832 = vmatprep.subr.bf16.mxu0 0
        %833 = vmatpush1.bf16.msra.mxu0 0
        %834 = vmatprep.subr.bf16.mxu0 0
        %835 = vmatpush1.bf16.msra.mxu0 0
        %836 = vmatprep.subr.bf16.mxu0 0
        %837 = vmatpush1.bf16.msra.mxu0 0
        %838 = vmatprep.subr.bf16.mxu0 0
        %839 = vmatpush1.bf16.msra.mxu0 0
        %840 = vmatprep.mubr.bf16.mxu0 0
        %841 = vmatmul.mubr.bf16.gmra.mrb[0].mxu0 %v799
        %v842 = vpop.f32.mrb[0].mxu0
        %v843 = vadd.f32 %v770, %v842
        %v844 = vpop.f32.mrb[0].mxu0
        %v845 = vpop.f32.mrb[0].mxu0
        %v846 = vadd.f32 %v775, %v845
        %v847 = vpop.f32.mrb[0].mxu0
        %848 = vmatprep.mubr.bf16.mxu0 0
        %849 = vmatmul.mubr.bf16.gmra.mrb[0].mxu0 %v802
        %v850 = vpop.f32.mrb[0].mxu0
        %v851 = vadd.f32 %v780, %v850
        %v852 = vpop.f32.mrb[0].mxu0
        %v853 = vpop.f32.mrb[0].mxu0
        %v854 = vadd.f32 %v785, %v853
        %v855 = vpop.f32.mrb[0].mxu0
        %856 = vdwg.mxu0
        %v857 = vtanh.pop %v843
        %v858 = vtanh.pop %v846
        %v859 = vtanh.pop %v851
        %v860 = vtanh.pop %v854
        %v861 = vsel %vm510, 1, 0
        %v862 = vcvt.s32.f32 %v861
        %v864 = vlaneseq
        %v865 = vshrl.u32 %v864, 7
        %v866 = vsub.s32 0, %v865
        %v867 = vrot.slane %v862, %v866
        %v869 = vmul.f32 %v857, %v867
        %v870 = vmul.f32 %v858, %v867
        %v871 = vmul.f32 %v859, %v867
        %v872 = vmul.f32 %v860, %v867
        %v873 = vpack.c.bf16 %v719, %v718
        %v874 = vpack.c.bf16 %v721, %v720
        %v875 = vpack.c.bf16 %v870, %v869
        %v876 = vpack.c.bf16 %v872, %v871
        %vm877 = vcmask 261120
        %v879 = vsel %vm877, %v873, 0
        %v882 = vsel %vm877, %v874, 0
        %884 = vmatprep.subr.bf16.mxu0 0
        %885 = vmatpush1.bf16.msra.mxu0 %v875
        %886 = vmatprep.subr.bf16.mxu0 0
        %887 = vmatpush1.bf16.msra.mxu0 %v876
        %888 = vmatprep.subr.bf16.mxu0 0
        %889 = vmatpush1.bf16.msra.mxu0 0
        %890 = vmatprep.subr.bf16.mxu0 0
        %891 = vmatpush1.bf16.msra.mxu0 0
        %892 = vmatprep.subr.bf16.mxu0 0
        %893 = vmatpush1.bf16.msra.mxu0 0
        %894 = vmatprep.subr.bf16.mxu0 0
        %895 = vmatpush1.bf16.msra.mxu0 0
        %896 = vmatprep.subr.bf16.mxu0 0
        %897 = vmatpush1.bf16.msra.mxu0 0
        %898 = vmatprep.subr.bf16.mxu0 0
        %899 = vmatpush1.bf16.msra.mxu0 0
        %900 = vmatprep.subr.bf16.mxu0 0
        %901 = vmatpush1.bf16.msra.mxu0 0
        %902 = vmatprep.subr.bf16.mxu0 0
        %903 = vmatpush1.bf16.msra.mxu0 0
        %904 = vmatprep.subr.bf16.mxu0 0
        %905 = vmatpush1.bf16.msra.mxu0 0
        %906 = vmatprep.subr.bf16.mxu0 0
        %907 = vmatpush1.bf16.msra.mxu0 0
        %908 = vmatprep.subr.bf16.mxu0 0
        %909 = vmatpush1.bf16.msra.mxu0 0
        %910 = vmatprep.subr.bf16.mxu0 0
        %911 = vmatpush1.bf16.msra.mxu0 0
        %912 = vmatprep.subr.bf16.mxu0 0
        %913 = vmatpush1.bf16.msra.mxu0 0
        %914 = vmatprep.subr.bf16.mxu0 0
        %915 = vmatpush1.bf16.msra.mxu0 0
        %916 = vmatprep.mubr.bf16.mxu0 0
        %917 = vmatmul.mubr.bf16.gmra.mrb[0].mxu0 %v879
        %v918 = vpop.f32.mrb[0].mxu0
        %v919 = vadd.f32 0.0, %v918
        %v920 = vpop.f32.mrb[0].mxu0
        %v921 = vpop.f32.mrb[0].mxu0
        %v922 = vadd.f32 0.0, %v921
        %v923 = vpop.f32.mrb[0].mxu0
        %924 = vmatprep.mubr.bf16.mxu0 0
        %925 = vmatmul.mubr.bf16.gmra.mrb[0].mxu0 %v882
        %v926 = vpop.f32.mrb[0].mxu0
        %v927 = vadd.f32 0.0, %v926
        %v928 = vpop.f32.mrb[0].mxu0
        %v929 = vpop.f32.mrb[0].mxu0
        %v930 = vadd.f32 0.0, %v929
        %v931 = vpop.f32.mrb[0].mxu0
        %932 = vdwg.mxu0
        %v933 = vlaneseq
        %v934 = vshrl.u32 %v933, 7
        %v935 = vsub.s32 0, %v934
        %v936 = vrot.slane %v861, %v935
        %vm937 = vcmp.eq.s32.totalorder %v936, 1
        %v938 = vsel %vm937, %v919, -1e+30
        %v939 = vsel %vm937, %v922, -1e+30
        %v940 = vsel %vm937, %v927, -1e+30
        %v941 = vsel %vm937, %v930, -1e+30
        %vm942 = vcmask 64512
        %v943 = vsel %vm942, %v938, -inf
        %944 = vmax.xlane.f32.xlu0 %v943
        %v945 = vpop.xlane.xlu0 %944
        %v946 = vsel %vm942, %v939, -inf
        %947 = vmax.xlane.f32.xlu0 %v946
        %v948 = vpop.xlane.xlu0 %947
        %v949 = vsel %vm942, %v940, -inf
        %950 = vmax.xlane.f32.xlu0 %v949
        %v951 = vpop.xlane.xlu0 %950
        %v952 = vsel %vm942, %v941, -inf
        %953 = vmax.xlane.f32.xlu0 %v952
        %v954 = vpop.xlane.xlu0 %953
        %v955 = vsub.f32 %v938, %v945
        %v956 = vsub.f32 %v939, %v948
        %v957 = vsub.f32 %v940, %v951
        %v958 = vsub.f32 %v941, %v954
        %v959 = vmul.f32 %v955, 1.442695
        %v960 = vpow.pop %v959
        %v961 = vmul.f32 %v956, 1.442695
        %v962 = vpow.pop %v961
        %v963 = vmul.f32 %v957, 1.442695
        %v964 = vpow.pop %v963
        %v965 = vmul.f32 %v958, 1.442695
        %v966 = vpow.pop %v965
        %v967 = vsel %vm942, %v960, 0.0
        %968 = vadd.xlane.f32.xlu0 %v967
        %v969 = vpop.xlane.xlu0 %968
        %v970 = vsel %vm942, %v962, 0.0
        %971 = vadd.xlane.f32.xlu0 %v970
        %v972 = vpop.xlane.xlu0 %971
        %v973 = vsel %vm942, %v964, 0.0
        %974 = vadd.xlane.f32.xlu0 %v973
        %v975 = vpop.xlane.xlu0 %974
        %v976 = vsel %vm942, %v966, 0.0
        %977 = vadd.xlane.f32.xlu0 %v976
        %v978 = vpop.xlane.xlu0 %977
        %v979 = vrcp.pop %v969
        %v980 = vrcp.pop %v972
        %v981 = vrcp.pop %v975
        %v982 = vrcp.pop %v978
        %v983 = vmul.f32 %v960, %v979
        %v984 = vmul.f32 %v962, %v980
        %v985 = vmul.f32 %v964, %v981
        %v986 = vmul.f32 %v966, %v982
        %v987 = vpack.c.bf16 %v984, %v983
        %v988 = vpack.c.bf16 %v986, %v985
        %v989 = vpack.c.bf16 %v682, %v682
        %v991 = vsel %vm942, %v987, 0
        %v994 = vsel %vm942, %v988, 0
        %vm996 = vcmask 1043456
        %v998 = vsel %vm996, %v989, 0
        %1000 = vmatprep.subr.bf16.mxu0 0
        %1001 = vmatpush1.bf16.msra.mxu0 %v998
        %1002 = vmatprep.subr.bf16.mxu0 0
        %1003 = vmatpush1.bf16.msra.mxu0 0
        %1004 = vmatprep.subr.bf16.mxu0 0
        %1005 = vmatpush1.bf16.msra.mxu0 0
        %1006 = vmatprep.subr.bf16.mxu0 0
        %1007 = vmatpush1.bf16.msra.mxu0 0
        %1008 = vmatprep.subr.bf16.mxu0 0
        %1009 = vmatpush1.bf16.msra.mxu0 0
        %1010 = vmatprep.subr.bf16.mxu0 0
        %1011 = vmatpush1.bf16.msra.mxu0 0
        %1012 = vmatprep.subr.bf16.mxu0 0
        %1013 = vmatpush1.bf16.msra.mxu0 0
        %1014 = vmatprep.subr.bf16.mxu0 0
        %1015 = vmatpush1.bf16.msra.mxu0 0
        %1016 = vmatprep.subr.bf16.mxu0 0
        %1017 = vmatpush1.bf16.msra.mxu0 0
        %1018 = vmatprep.subr.bf16.mxu0 0
        %1019 = vmatpush1.bf16.msra.mxu0 0
        %1020 = vmatprep.subr.bf16.mxu0 0
        %1021 = vmatpush1.bf16.msra.mxu0 0
        %1022 = vmatprep.subr.bf16.mxu0 0
        %1023 = vmatpush1.bf16.msra.mxu0 0
        %1024 = vmatprep.subr.bf16.mxu0 0
        %1025 = vmatpush1.bf16.msra.mxu0 0
        %1026 = vmatprep.subr.bf16.mxu0 0
        %1027 = vmatpush1.bf16.msra.mxu0 0
        %1028 = vmatprep.subr.bf16.mxu0 0
        %1029 = vmatpush1.bf16.msra.mxu0 0
        %1030 = vmatprep.subr.bf16.mxu0 0
        %1031 = vmatpush1.bf16.msra.mxu0 0
        %1032 = vmatprep.mubr.bf16.mxu0 0
        %1033 = vmatmul.mubr.bf16.gmra.mrb[0].mxu0 %v991
        %v1034 = vpop.f32.mrb[0].mxu0
        %v1035 = vadd.f32 0.0, %v1034
        %v1036 = vpop.f32.mrb[0].mxu0
        %v1037 = vpop.f32.mrb[0].mxu0
        %v1038 = vadd.f32 0.0, %v1037
        %v1039 = vpop.f32.mrb[0].mxu0
        %1040 = vmatprep.mubr.bf16.mxu0 0
        %1041 = vmatmul.mubr.bf16.gmra.mrb[0].mxu0 %v994
        %v1042 = vpop.f32.mrb[0].mxu0
        %v1043 = vadd.f32 0.0, %v1042
        %v1044 = vpop.f32.mrb[0].mxu0
        %v1045 = vpop.f32.mrb[0].mxu0
        %v1046 = vadd.f32 0.0, %v1045
        %v1047 = vpop.f32.mrb[0].mxu0
        %1048 = vdwg.mxu0
        %1049 = vset.pattern.permute.xlu0 0
        %1050 = vperm.xlu0 %1049, %v501
        %v1051 = vpop.permute.xlu0 %1050
        %1052 = vset.pattern.permute.xlu0 0
        %1053 = vperm.xlu0 %1052, %v502
        %v1054 = vpop.permute.xlu0 %1053
        %1055 = vset.pattern.permute.xlu0 0
        %1056 = vperm.xlu0 %1055, %v503
        %v1057 = vpop.permute.xlu0 %1056
        %1058 = vset.pattern.permute.xlu0 0
        %1059 = vperm.xlu0 %1058, %v504
        %v1060 = vpop.permute.xlu0 %1059
        %vm1061 = vcmp.eq.s32.totalorder %v1051, 1
        %vm1062 = vcmp.eq.s32.totalorder %v1054, 1
        %vm1063 = vcmp.eq.s32.totalorder %v1057, 1
        %vm1064 = vcmp.eq.s32.totalorder %v1060, 1
        %v1065 = vsel %vm1061, %v1035, -1e+30
        %v1066 = vsel %vm1062, %v1038, -1e+30
        %v1067 = vsel %vm1063, %v1043, -1e+30
        %v1068 = vsel %vm1064, %v1046, -1e+30
        %v1069 = vsel %vm877, %v1065, -inf
        %v1070 = vrot.slane %v1069, 4
        %v1071 = vmax.f32 %v1069, %v1070
        %v1072 = vrot.slane %v1071, 2
        %v1073 = vmax.f32 %v1071, %v1072
        %v1074 = vrot.slane %v1073, 1
        %v1075 = vmax.f32 %v1073, %v1074
        %v1076 = vsel %vm877, %v1066, -inf
        %v1077 = vrot.slane %v1076, 4
        %v1078 = vmax.f32 %v1076, %v1077
        %v1079 = vrot.slane %v1078, 2
        %v1080 = vmax.f32 %v1078, %v1079
        %v1081 = vrot.slane %v1080, 1
        %v1082 = vmax.f32 %v1080, %v1081
        %v1083 = vsel %vm877, %v1067, -inf
        %v1084 = vrot.slane %v1083, 4
        %v1085 = vmax.f32 %v1083, %v1084
        %v1086 = vrot.slane %v1085, 2
        %v1087 = vmax.f32 %v1085, %v1086
        %v1088 = vrot.slane %v1087, 1
        %v1089 = vmax.f32 %v1087, %v1088
        %v1090 = vsel %vm877, %v1068, -inf
        %v1091 = vrot.slane %v1090, 4
        %v1092 = vmax.f32 %v1090, %v1091
        %v1093 = vrot.slane %v1092, 2
        %v1094 = vmax.f32 %v1092, %v1093
        %v1095 = vrot.slane %v1094, 1
        %v1096 = vmax.f32 %v1094, %v1095
        %v1097 = vpack.c.bf16 %v1075, %v1075
        %v1098 = vpack.c.bf16 %v1082, %v1082
        %v1099 = vpack.c.bf16 %v1089, %v1089
        %v1100 = vpack.c.bf16 %v1096, %v1096
        %v1101 = vld [vmem:[%s8] sm:$0xf]
        %v1102 = vld [vmem:[%s8 + $0x4] sm:$0xf]
        %v1103 = vld [vmem:[%s8 + $0x8] sm:$0xf]
        %v1104 = vld [vmem:[%s8 + $0xc] sm:$0xf]
        %v1105 = vld [vmem:[%s9] sm:$0x1]
        %v1107 = vlaneseq
        %v1108 = vshrl.u32 %v1107, 7
        %v1109 = vsub.s32 0, %v1108
        %v1110 = vrot.slane %v1105, %v1109
        %v1116 = vunpack.c.l.b16 %v1097
        %v1117 = vunpack.c.l.b16 %v1098
        %v1118 = vunpack.c.l.b16 %v1099
        %v1119 = vunpack.c.l.b16 %v1100
        %vm1120 = vcmask 1041409
        %v1121 = vsel %vm1120, %v1117, %v1116
        %vm1122 = vcmask 1042434
        %v1123 = vsel %vm1122, %v1118, %v1121
        %vm1124 = vcmask 1043459
        %v1125 = vsel %vm1124, %v1119, %v1123
        %v1126 = vpack.c.b16 %v1125, %v1125
        %v1131 = vunpack.c.l.b16 %v1101
        %v1132 = vunpack.c.l.b16 %v1102
        %v1133 = vunpack.c.l.b16 %v1103
        %v1134 = vunpack.c.l.b16 %v1104
        %v1135 = vpack.c.b16 %v1132, %v1131
        %v1136 = vpack.c.b16 %v1134, %v1133
        %v1140 = vsel %vm877, %v1126, 0
        %1142 = vmatprep.subr.bf16.mxu0 0
        %1143 = vmatpush1.bf16.msra.mxu0 %v1135
        %1144 = vmatprep.subr.bf16.mxu0 0
        %1145 = vmatpush1.bf16.msra.mxu0 %v1136
        %1146 = vmatprep.subr.bf16.mxu0 0
        %1147 = vmatpush1.bf16.msra.mxu0 0
        %1148 = vmatprep.subr.bf16.mxu0 0
        %1149 = vmatpush1.bf16.msra.mxu0 0
        %1150 = vmatprep.subr.bf16.mxu0 0
        %1151 = vmatpush1.bf16.msra.mxu0 0
        %1152 = vmatprep.subr.bf16.mxu0 0
        %1153 = vmatpush1.bf16.msra.mxu0 0
        %1154 = vmatprep.subr.bf16.mxu0 0
        %1155 = vmatpush1.bf16.msra.mxu0 0
        %1156 = vmatprep.subr.bf16.mxu0 0
        %1157 = vmatpush1.bf16.msra.mxu0 0
        %1158 = vmatprep.subr.bf16.mxu0 0
        %1159 = vmatpush1.bf16.msra.mxu0 0
        %1160 = vmatprep.subr.bf16.mxu0 0
        %1161 = vmatpush1.bf16.msra.mxu0 0
        %1162 = vmatprep.subr.bf16.mxu0 0
        %1163 = vmatpush1.bf16.msra.mxu0 0
        %1164 = vmatprep.subr.bf16.mxu0 0
        %1165 = vmatpush1.bf16.msra.mxu0 0
        %1166 = vmatprep.subr.bf16.mxu0 0
        %1167 = vmatpush1.bf16.msra.mxu0 0
        %1168 = vmatprep.subr.bf16.mxu0 0
        %1169 = vmatpush1.bf16.msra.mxu0 0
        %1170 = vmatprep.subr.bf16.mxu0 0
        %1171 = vmatpush1.bf16.msra.mxu0 0
        %1172 = vmatprep.subr.bf16.mxu0 0
        %1173 = vmatpush1.bf16.msra.mxu0 0
        %1174 = vmatprep.mubr.bf16.mxu0 0
        %1175 = vmatmul.mubr.bf16.gmra.mrb[0].mxu0 %v1140
        %v1176 = vpop.f32.mrb[0].mxu0
        %v1177 = vadd.f32 %v1110, %v1176
        %v1178 = vpop.f32.mrb[0].mxu0
        %v1179 = vpop.f32.mrb[0].mxu0
        %v1180 = vpop.f32.mrb[0].mxu0
        %1181 = vdwg.mxu0
        %v1182 = vmax.f32 %v1177, 0.0
        %v1183 = vpack.c.bf16 %v1182, %v1182
        %v1184 = vld [vmem:[%s10] sm:$0xf]
        %v1185 = vld [vmem:[%s10 + $0x4] sm:$0xf]
        %v1186 = vld [vmem:[%s10 + $0x8] sm:$0xf]
        %v1187 = vld [vmem:[%s10 + $0xc] sm:$0xf]
        %v1188 = vld [vmem:[#allocation2] sm:$0x1]
        %v1190 = vlaneseq
        %v1191 = vshrl.u32 %v1190, 7
        %v1192 = vsub.s32 0, %v1191
        %v1193 = vrot.slane %v1188, %v1192
        %v1199 = vunpack.c.l.b16 %v1184
        %v1200 = vunpack.c.l.b16 %v1185
        %v1201 = vunpack.c.l.b16 %v1186
        %v1202 = vunpack.c.l.b16 %v1187
        %v1203 = vpack.c.b16 %v1200, %v1199
        %v1204 = vpack.c.b16 %v1202, %v1201
        %v1208 = vsel %vm877, %v1183, 0
        %1210 = vmatprep.subr.bf16.mxu0 0
        %1211 = vmatpush1.bf16.msra.mxu0 %v1203
        %1212 = vmatprep.subr.bf16.mxu0 0
        %1213 = vmatpush1.bf16.msra.mxu0 %v1204
        %1214 = vmatprep.subr.bf16.mxu0 0
        %1215 = vmatpush1.bf16.msra.mxu0 0
        %1216 = vmatprep.subr.bf16.mxu0 0
        %1217 = vmatpush1.bf16.msra.mxu0 0
        %1218 = vmatprep.subr.bf16.mxu0 0
        %1219 = vmatpush1.bf16.msra.mxu0 0
        %1220 = vmatprep.subr.bf16.mxu0 0
        %1221 = vmatpush1.bf16.msra.mxu0 0
        %1222 = vmatprep.subr.bf16.mxu0 0
        %1223 = vmatpush1.bf16.msra.mxu0 0
        %1224 = vmatprep.subr.bf16.mxu0 0
        %1225 = vmatpush1.bf16.msra.mxu0 0
        %1226 = vmatprep.subr.bf16.mxu0 0
        %1227 = vmatpush1.bf16.msra.mxu0 0
        %1228 = vmatprep.subr.bf16.mxu0 0
        %1229 = vmatpush1.bf16.msra.mxu0 0
        %1230 = vmatprep.subr.bf16.mxu0 0
        %1231 = vmatpush1.bf16.msra.mxu0 0
        %1232 = vmatprep.subr.bf16.mxu0 0
        %1233 = vmatpush1.bf16.msra.mxu0 0
        %1234 = vmatprep.subr.bf16.mxu0 0
        %1235 = vmatpush1.bf16.msra.mxu0 0
        %1236 = vmatprep.subr.bf16.mxu0 0
        %1237 = vmatpush1.bf16.msra.mxu0 0
        %1238 = vmatprep.subr.bf16.mxu0 0
        %1239 = vmatpush1.bf16.msra.mxu0 0
        %1240 = vmatprep.subr.bf16.mxu0 0
        %1241 = vmatpush1.bf16.msra.mxu0 0
        %1242 = vmatprep.mubr.bf16.mxu0 0
        %1243 = vmatmul.mubr.bf16.gmra.mrb[0].mxu0 %v1208
        %v1244 = vpop.f32.mrb[0].mxu0
        %v1245 = vadd.f32 %v1193, %v1244
        %v1246 = vpop.f32.mrb[0].mxu0
        %v1247 = vpop.f32.mrb[0].mxu0
        %v1248 = vpop.f32.mrb[0].mxu0
        %1249 = vdwg.mxu0
        %vm1250 = vcmp.eq.s32.totalorder %v723, %v512
        %v1251 = vsel %vm1250, 1, 0
        %v1252 = vcvt.s32.f32 %v1251
        %1254 = vset.pattern.permute.xlu0 0
        %1255 = vperm.xlu0 %1254, %v1245
        %v1256 = vpop.permute.xlu0 %1255
        %v1258 = vmul.f32 %v1256, %v1252
        %v1259 = vsel %vm996, %v1258, 0.0
        %v1260 = vrot.slane %v1259, 4
        %v1261 = vadd.f32 %v1259, %v1260
        %v1262 = vrot.slane %v1261, 2
        %v1263 = vadd.f32 %v1261, %v1262
        %v1264 = vrot.slane %v1263, 1
        %v1265 = vadd.f32 %v1263, %v1264
        %vm1266 = vcmp.lt.s32.totalorder %v512, 4
        %v1267 = vsel %vm1266, %v1265, -1e+30
        %1268 = vmax.xlane.f32.xlu0 %v1267
        %v1269 = vpop.xlane.xlu0 %1268
        %v1270 = vsub.f32 %v1267, %v1269
        %v1271 = vmul.f32 %v1270, 1.442695
        %v1272 = vpow.pop %v1271
        %1273 = vadd.xlane.f32.xlu0 %v1272
        %v1274 = vpop.xlane.xlu0 %1273
        %v1275 = vlog2.pop %v1274
        %v1276 = vmul.f32 %v1275, 0.6931472
        %v1277 = vsub.f32 %v1270, %v1276
        %1278 = vst [vmem:[%s457] sm:$0x1] %v1277
        %v1279 = vmul.f32 %v1277, %v484
        %v1280 = vsel %vm804, %v1279, 0.0
        %1281 = vadd.xlane.f32.xlu0 %v1280
        %v1282 = vpop.xlane.xlu0 %1281
        %v1283 = vsub.f32 0.0, %v1282
        %vm1284 = vcmask 0
        %1285 = vst.msk [vmem:[%s476] sm:$0x1] %vm1284, %v1283
        %s1286 = sand.u32 %s305, 1
        %s1287 = scalar_lea.sflag [#allocation4], %s1286
        %s1288 = sand.u32 %s305, 1
        %s1289 = scalar_lea.vmem [#allocation3], %s1288
        %p1290 = scmp.lt.s32.totalorder %s30, 1
        %s1291 = scalar_select %p1290, %s30, 1
        %s1292 = scalar_lea.vmem %s13, %s1291
        // Predicated region
        $region69: #{tpu_custom_call.1} parent=67 // pred_check
          %p1293 = pneg %p315
        $region70: #{tpu_custom_call.1} parent=67 // pred_check_branch
          %1295 = sbr.rel (%p1293) target = $region72
        $region71: #{tpu_custom_call.1} parent=67 // pred_region
          %s1297 = ssub.s32 16, 16
          %1298 = vsyncadd %s1287, %s1297
          %s1299 = smul.addr %s30, 16
          %s1300 = scalar_lea.hbm %s12, %s1299
          %s1302 = sshll.u32 %s1289, 4
          %s1303 = int_to_ptr.vmem [resolvable:$true] %s1302
          %1305 = dma.vmem_to_hbm [thread:$0]  %s1303, 16, %s1300, %s1287
        $region72: #{tpu_custom_call.1} parent=67 // pred_fallthru
          _
        // Predicated region
        $region73: #{tpu_custom_call.1} parent=67 // pred_check
          %p1306 = pneg %p341
        $region74: #{tpu_custom_call.1} parent=67 // pred_check_branch
          %1308 = sbr.rel (%p1306) target = $region76
        $region75: #{tpu_custom_call.1} parent=67 // pred_region
          _
        $region76: #{tpu_custom_call.1} parent=67 // pred_fallthru
          _
      $region68: #{tpu_custom_call.1} parent=5 // pred_fallthru
        _
      %p1309 = scmp.le.s32.totalorder 2, %s25
      // Predicated region
      $region77: #{tpu_custom_call.1} parent=5 // pred_check
        %p1310 = pneg %p1309
      $region78: #{tpu_custom_call.1} parent=5 // pred_check_branch
        %1312 = sbr.rel (%p1310) target = $region80
      $region79: #{tpu_custom_call.1} parent=5 // pred_region
        %s1313 = ssub.s32 %s25, 2
        // Predicated region
        $region81: #{tpu_custom_call.1} parent=79 // pred_check
          %p1314 = pneg %p321
        $region82: #{tpu_custom_call.1} parent=79 // pred_check_branch
          %1316 = sbr.rel (%p1314) target = $region84
        $region83: #{tpu_custom_call.1} parent=79 // pred_region
          %s1317 = sand.u32 %s306, 1
          %s1318 = scalar_lea.sflag [#allocation4], %s1317
          %s1319 = sand.u32 %s306, 1
          %s1320 = scalar_lea.vmem [#allocation3], %s1319
          %1321 = dma.done %s1318, 16
        $region84: #{tpu_custom_call.1} parent=79 // pred_fallthru
          _
        // Predicated region
        $region85: #{tpu_custom_call.1} parent=79 // pred_check
          %p1322 = pneg %p347
        $region86: #{tpu_custom_call.1} parent=79 // pred_check_branch
          %1324 = sbr.rel (%p1322) target = $region88
        $region87: #{tpu_custom_call.1} parent=79 // pred_region
          %p1325 = scmp.lt.s32.totalorder %s31, 1
          %s1326 = scalar_select %p1325, %s31, 1
          %s1327 = scalar_lea.vmem %s13, %s1326
        $region88: #{tpu_custom_call.1} parent=79 // pred_fallthru
          _
      $region80: #{tpu_custom_call.1} parent=5 // pred_fallthru
        _
    $region6: #{tpu_custom_call.1} parent=1 // loop_footer
      %s29 = sadd.s32 1, %s25
    $region7: #{tpu_custom_call.1} parent=1 // loop_footer_branch
      %24 = sbr.rel target = $region3
    $region8: #{tpu_custom_call.1} parent=1 // loop_exit
      _
    %1328 = vsyncpa [#allocation4], 1
    %s1329 = scalar_lea.sflag [#allocation4], 1
    %1330 = vsyncpa %s1329, 1

</llo_original>
